<compile_context>
chip_gen: v7x
topology: tpu7x:2x2x1
jax: 0.10.0
libtpu: 0.0.40
codegen_flags: <defaults>
</compile_context>

<pallas_src>
import jax
import jax.numpy as jnp
from jax import lax
from jax.experimental import pallas as pl
from jax.experimental.pallas import tpu as pltpu


def _round_up(n, m):
    return ((n + m - 1) // m) * m


def _largest_divisor_leq(n, cap):
    for d in range(min(n, cap), 0, -1):
        if n % d == 0:
            return d
    return 1


def rnn_kernel(x_ref, w_ih_t_ref, w_hh_t_ref, b_ref, w_fc_ref, b_fc_ref,
               o_ref, h_ref, xw_ref):
    """One (batch_tile, seq_tile) grid step of the streamed RNN.

    x_ref      : (T, Bt, D)   bf16 input tile (time-major)
    w_ih_t_ref : (D, Hp)      bf16 input->hidden weight (pre-transposed, zero-padded)
    w_hh_t_ref : (Hp, Hp)     bf16 hidden->hidden weight (pre-transposed, zero-padded)
    b_ref      : (1, Hp)      f32  combined bias b_ih + b_hh (zero-padded)
    w_fc_ref   : (1, Hp)      f32  FC weight row (zero-padded)
    b_fc_ref   : (1, 1)       f32  FC bias (SMEM)
    o_ref      : (Bt, 128)    f32  lane-dense output block (written on last seq step)
    h_ref      : (Bt, Hp)     f32  hidden-state carry (persists across seq steps)
    xw_ref     : (T, Bt, Hp)  bf16 scratch: hoisted input projection
    """
    s = pl.program_id(1)
    T, Bt, D = x_ref.shape
    Hp = h_ref.shape[1]
    f32, bf16 = jnp.float32, jnp.bfloat16

    @pl.when(s == 0)
    def _init():
        h_ref[...] = jnp.zeros_like(h_ref)

    # Hoisted input projection: one tall (T*Bt, D) x (D, Hp) bf16 MXU matmul
    # per tile (f32 accumulate), bias folded in once, stored bf16.
    x_flat = x_ref[...].reshape(T * Bt, D)
    xw = jnp.dot(x_flat, w_ih_t_ref[...], preferred_element_type=f32)
    xw_ref[...] = (xw.reshape(T, Bt, Hp) + b_ref[...]).astype(xw_ref.dtype)

    # bf16 weight -> native MXU path. Carry / accumulate / tanh stay f32.
    w_hh_t = w_hh_t_ref[...]

    def cell(xwt, h):
        z = xwt.astype(f32) + jnp.dot(h.astype(bf16), w_hh_t,
                                      preferred_element_type=f32)
        return jnp.tanh(z)

    # Manual partial unroll: <=8 timesteps traced per rolled loop iteration
    # (full unroll at large T blows up vreg pressure / code size).
    unroll = _largest_divisor_leq(T, 8)
    n_outer = T // unroll

    # Split the batch tile into two independent halves: their recurrences share
    # no data, so the scheduler can overlap half-B's h@W_hh (MXU) with half-A's
    # tanh (EUP), hiding the serial MXU<->EUP latency.
    split = (Bt >= 16) and (Bt % 16 == 0)

    if split:
        half = Bt // 2

        def outer(i, carry):
            hA, hB = carry
            for j in range(unroll):
                xwt = xw_ref[i * unroll + j]
                hA = cell(xwt[:half], hA)
                hB = cell(xwt[half:], hB)
            return hA, hB

        h0 = h_ref[...]
        carry0 = (h0[:half], h0[half:])
        if n_outer == 1:
            hA, hB = outer(0, carry0)
        else:
            hA, hB = lax.fori_loop(0, n_outer, outer, carry0)
        h_ref[...] = jnp.concatenate([hA, hB], axis=0)
    else:
        def outer(i, h):
            for j in range(unroll):
                h = cell(xw_ref[i * unroll + j], h)
            return h

        if n_outer == 1:
            h_ref[...] = outer(0, h_ref[...])
        else:
            h_ref[...] = lax.fori_loop(0, n_outer, outer, h_ref[...])

    # Final linear head: VPU multiply + lane reduction, emitted as a dense
    # (Bt, 128) block (no masked last-dim-1 stores).
    @pl.when(s == pl.num_programs(1) - 1)
    def _head():
        h = h_ref[...]
        res = jnp.sum(h * w_fc_ref[...], axis=-1, keepdims=True) + b_fc_ref[0, 0]
        o_ref[...] = jnp.broadcast_to(res, o_ref.shape)


def rnn_forward(x, w_ih, w_hh, b_ih, b_hh, w_fc, b_fc,
                *, seq_tile=None, batch_tile=None):
    """x: (B, S, D) f32. Returns (B, 1) f32."""
    f32, bf16 = jnp.float32, jnp.bfloat16
    B, S, D = x.shape
    H = w_hh.shape[0]

    # Lane/sublane-dense padded sizes (zero padding keeps the math exact:
    # padded hidden units stay at tanh(0)=0, padded batch rows are sliced off).
    Bp = _round_up(max(B, 8), 8)          # sublane-dense batch
    Hp = _round_up(H, 128)                # lane-dense hidden

    if batch_tile is None:
        cap = 128   # TODO(synk): allow 256-row batch tiles on v6e/v7x for very large Bp
        if Bp >= 16:
            cap = min(cap, Bp // 2)       # keep >=2 batch blocks (v7x: both TCs busy)
        Bt = 8 * _largest_divisor_leq(Bp // 8, max(cap // 8, 1))
    else:
        Bt = batch_tile
    Ts = seq_tile or _largest_divisor_leq(S, 64)
    assert Bp % Bt == 0 and S % Ts == 0

    # ---- parameter prep (plain JAX glue) ----
    x_p = jnp.zeros((S, Bp, D), bf16)
    x_p = x_p.at[:, :B, :].set(
        jnp.asarray(x, f32).transpose(1, 0, 2).astype(bf16))           # (S,Bp,D)

    w_ih_t = jnp.zeros((D, Hp), bf16).at[:, :H].set(
        jnp.asarray(w_ih, f32).T.astype(bf16))                          # (D,Hp)
    w_hh_t = jnp.zeros((Hp, Hp), bf16).at[:H, :H].set(
        jnp.asarray(w_hh, f32).T.astype(bf16))                          # (Hp,Hp)
    bias_p = jnp.zeros((1, Hp), f32).at[0, :H].set(
        jnp.asarray(b_ih, f32) + jnp.asarray(b_hh, f32))                # (1,Hp)
    w_fc_row = jnp.zeros((1, Hp), f32).at[0, :H].set(
        jnp.asarray(w_fc, f32).reshape(H))                              # (1,Hp)
    b_fc2 = jnp.asarray(b_fc, f32).reshape(1, 1)                        # (1,1) -> SMEM

    nb, ns = Bp // Bt, S // Ts

    # ---- VMEM budget (padding-aware) ----
    def _est(weight_bufs):
        Dl = _round_up(D, 128)                 # x lanes pad to 128
        return (2 * Ts * Bt * Dl * 2           # double-buffered x tiles (bf16)
                + weight_bufs * (_round_up(D, 16) * Hp * 2     # W_ih^T (bf16, 16-sublane pad)
                                 + Hp * Hp * 2                 # W_hh^T (bf16)
                                 + 2 * 8 * Hp * 4)             # bias + fc row (f32)
                + 2 * Bt * 128 * 4             # output block
                + Bt * Hp * 4                  # h carry (f32)
                + Ts * Bt * Hp * 2)            # hoisted projection scratch (bf16)

    try:
        phys_vmem = pltpu.get_tpu_info().vmem_capacity_bytes
    except Exception:
        phys_vmem = 64 * 1024 * 1024           # conservative (v7x per-TC size)
    cap_bytes = (phys_vmem * 3) // 4           # ~48 MiB v7x, ~96 MiB v5e/v6e

    def _call(single_buffer_weights):
        weight_bufs = 1 if single_buffer_weights else 2
        vmem_limit = int(min(cap_bytes,
                             max(16 * 1024 * 1024, 2 * _est(weight_bufs))))
        const_kw = ({"pipeline_mode": pl.Buffered(1)}
                    if single_buffer_weights else {})
        grid_spec = pltpu.PrefetchScalarGridSpec(
            num_scalar_prefetch=0,
            grid=(nb, ns),
            in_specs=[
                pl.BlockSpec((Ts, Bt, D), lambda bi, si: (si, bi, 0)),   # x tile
                pl.BlockSpec((D, Hp), lambda bi, si: (0, 0), **const_kw),   # W_ih^T
                pl.BlockSpec((Hp, Hp), lambda bi, si: (0, 0), **const_kw),  # W_hh^T
                pl.BlockSpec((1, Hp), lambda bi, si: (0, 0), **const_kw),   # bias
                pl.BlockSpec((1, Hp), lambda bi, si: (0, 0), **const_kw),   # fc row
                pl.BlockSpec(memory_space=pltpu.MemorySpace.SMEM),          # fc bias
            ],
            out_specs=pl.BlockSpec((Bt, 128), lambda bi, si: (bi, 0)),
            scratch_shapes=[
                pltpu.VMEM((Bt, Hp), jnp.float32),       # h carry (f32)
                pltpu.VMEM((Ts, Bt, Hp), jnp.bfloat16),  # hoisted x @ W_ih^T + b
            ],
        )
        return pl.pallas_call(
            rnn_kernel,
            out_shape=jax.ShapeDtypeStruct((Bp, 128), jnp.float32),
            grid_spec=grid_spec,
            compiler_params=pltpu.CompilerParams(
                dimension_semantics=("parallel", "arbitrary"),
                vmem_limit_bytes=vmem_limit),
        )(x_p, w_ih_t, w_hh_t, bias_p, w_fc_row, b_fc2)

    try:
        out_p = _call(True)
    except Exception:
        # Fallback if this JAX build rejects single-buffered constant blocks.
        out_p = _call(False)

    return out_p[:B, :1]


def _ref_forward(x, w_ih, w_hh, b_ih, b_hh, w_fc, b_fc):
    """Pure-JAX f32 reference mirroring torch.nn.RNN + Linear."""
    B, S, D = x.shape
    H = w_hh.shape[0]
    h = jnp.zeros((B, H), jnp.float32)
    for t in range(S):
        h = jnp.tanh(x[:, t, :] @ w_ih.T + b_ih + h @ w_hh.T + b_hh)
    return h @ w_fc.T + b_fc


if __name__ == "__main__":
    # Small shapes consistent with the module: (batch, seq_len, input_dim).
    B, S, D, H = 2, 8, 4, 32

    key = jax.random.PRNGKey(0)
    kx, k1, k2, k3, k4, k5, k6, kx2 = jax.random.split(key, 8)

    x = jax.random.normal(kx, (B, S, D), dtype=jnp.float32)

    # Deterministic init matching nn.RNN / nn.Linear: U(-1/sqrt(H), 1/sqrt(H)).
    bound = 1.0 / jnp.sqrt(jnp.float32(H))
    w_ih = jax.random.uniform(k1, (H, D), jnp.float32, -bound, bound)
    w_hh = jax.random.uniform(k2, (H, H), jnp.float32, -bound, bound)
    b_ih = jax.random.uniform(k3, (H,), jnp.float32, -bound, bound)
    b_hh = jax.random.uniform(k4, (H,), jnp.float32, -bound, bound)
    w_fc = jax.random.uniform(k5, (1, H), jnp.float32, -bound, bound)
    b_fc = jax.random.uniform(k6, (1,), jnp.float32, -bound, bound)

    # Tolerance: x/W_ih/W_hh and the hoisted projection are bf16 on the MXU;
    # accumulation, the hidden carry and tanh stay f32.
    ATOL = 3e-2

    # Test 1: seq_tile=4 -> grid=(1, 2): exercises the hidden-state carry
    # across sequence grid steps.
    out = rnn_forward(x, w_ih, w_hh, b_ih, b_hh, w_fc, b_fc, seq_tile=4)
    out = jax.block_until_ready(out)
    ref = _ref_forward(x, w_ih, w_hh, b_ih, b_hh, w_fc, b_fc)
    assert out.shape == (B, 1), out.shape
    assert jnp.allclose(out, ref, atol=ATOL, rtol=ATOL), (out, ref)

    # Test 2: larger batch / sequence -> grid=(2, 2) with Bt=16: exercises the
    # 2-block "parallel" batch axis (v7x megacore path), the interleaved
    # two-half recurrence, and the rolled partial-unroll time loop.
    B2, S2 = 32, 24
    x2 = jax.random.normal(kx2, (B2, S2, D), dtype=jnp.float32)
    out2 = rnn_forward(x2, w_ih, w_hh, b_ih, b_hh, w_fc, b_fc, seq_tile=12)
    out2 = jax.block_until_ready(out2)
    ref2 = _ref_forward(x2, w_ih, w_hh, b_ih, b_hh, w_fc, b_fc)
    assert out2.shape == (B2, 1), out2.shape
    assert jnp.allclose(out2, ref2, atol=ATOL, rtol=ATOL), (out2, ref2)

    print("KERNEL_OK")
</pallas_src>

<mosaic_0001>
module attributes {stable_mosaic.version = 11 : i64} {
  func.func @rnn_kernel(%arg0: i32, %arg1: i32, %arg2: memref<4x8x4xbf16, #tpu.memory_space<vmem>>, %arg3: memref<4x128xbf16, #tpu.memory_space<vmem>>, %arg4: memref<128x128xbf16, #tpu.memory_space<vmem>>, %arg5: memref<1x128xf32, #tpu.memory_space<vmem>>, %arg6: memref<1x128xf32, #tpu.memory_space<vmem>>, %arg7: memref<1x1xf32, #tpu.memory_space<smem>>, %arg8: memref<8x128xf32, #tpu.memory_space<vmem>>, %arg9: memref<8x128xf32, #tpu.memory_space<vmem>>, %arg10: memref<4x8x128xbf16, #tpu.memory_space<vmem>>) attributes {dimension_semantics = [#tpu.dimension_semantics<parallel>, #tpu.dimension_semantics<arbitrary>], iteration_bounds = array<i64: 1, 2>, scalar_prefetch = 0 : i64, scratch_operands = 2 : i64, tpu.core_type = #tpu.core_type<tc>, window_params = [{transform_indices = @transform_0, window_bounds = array<i64: 4, 8, 4>}, {pipeline_mode = #tpu.pipeline_mode<synchronous>, transform_indices = @transform_1, window_bounds = array<i64: 4, 128>}, {pipeline_mode = #tpu.pipeline_mode<synchronous>, transform_indices = @transform_2, window_bounds = array<i64: 128, 128>}, {pipeline_mode = #tpu.pipeline_mode<synchronous>, transform_indices = @transform_3, window_bounds = array<i64: 1, 128>}, {pipeline_mode = #tpu.pipeline_mode<synchronous>, transform_indices = @transform_4, window_bounds = array<i64: 1, 128>}, {transform_indices = @transform_5, window_bounds = array<i64: 1, 1>}, {transform_indices = @transform_6, window_bounds = array<i64: 8, 128>}]} {
    %c0_i32 = arith.constant 0 : i32
    %0 = arith.cmpi eq, %arg1, %c0_i32 : i32
    %1 = arith.extui %0 : i1 to i32
    %c0_i32_0 = arith.constant 0 : i32
    %2 = arith.cmpi ne, %1, %c0_i32_0 : i32
    scf.if %2 {
      %cst_30 = arith.constant 0.000000e+00 : f32
      %48 = vector.broadcast %cst_30 : f32 to vector<8x128xf32>
      %c0_31 = arith.constant 0 : index
      %c0_32 = arith.constant 0 : index
      %49 = vector.load %arg9[%c0_31, %c0_32] : memref<8x128xf32, #tpu.memory_space<vmem>>, vector<8x128xf32>
      tpu.vector_store %arg9[%c0_31, %c0_32], %48 {strides = array<i32>} : memref<8x128xf32, #tpu.memory_space<vmem>>, vector<8x128xf32>,
    } else {
    }
    %c0 = arith.constant 0 : index
    %c0_1 = arith.constant 0 : index
    %c0_2 = arith.constant 0 : index
    %3 = vector.load %arg2[%c0, %c0_1, %c0_2] : memref<4x8x4xbf16, #tpu.memory_space<vmem>>, vector<4x8x4xbf16>
    %4 = vector.shape_cast %3 : vector<4x8x4xbf16> to vector<32x4xbf16>
    %c0_3 = arith.constant 0 : index
    %c0_4 = arith.constant 0 : index
    %5 = vector.load %arg3[%c0_3, %c0_4] : memref<4x128xbf16, #tpu.memory_space<vmem>>, vector<4x128xbf16>
    %cst = arith.constant dense<0.000000e+00> : vector<32x128xf32>
    %6 = tpu.matmul %4, %5, %cst {dimension_numbers = #tpu.dot_dimension_numbers<[1], [0], [0], [1], [0, 0, 1, 1], [], []>} : vector<32x4xbf16>, vector<4x128xbf16>, vector<32x128xf32> -> vector<32x128xf32>
    %7 = vector.shape_cast %6 : vector<32x128xf32> to vector<4x8x128xf32>
    %c0_5 = arith.constant 0 : index
    %c0_6 = arith.constant 0 : index
    %8 = vector.load %arg5[%c0_5, %c0_6] : memref<1x128xf32, #tpu.memory_space<vmem>>, vector<1x128xf32>
    %9 = vector.shape_cast %8 : vector<1x128xf32> to vector<1x1x128xf32>
    %10 = vector.broadcast %9 : vector<1x1x128xf32> to vector<4x8x128xf32>
    %11 = arith.addf %7, %10 : vector<4x8x128xf32>
    %12 = arith.truncf %11 : vector<4x8x128xf32> to vector<4x8x128xbf16>
    %c0_7 = arith.constant 0 : index
    %c0_8 = arith.constant 0 : index
    %c0_9 = arith.constant 0 : index
    %13 = vector.load %arg10[%c0_7, %c0_8, %c0_9] : memref<4x8x128xbf16, #tpu.memory_space<vmem>>, vector<4x8x128xbf16>
    tpu.vector_store %arg10[%c0_7, %c0_8, %c0_9], %12 {strides = array<i32>} : memref<4x8x128xbf16, #tpu.memory_space<vmem>>, vector<4x8x128xbf16>,
    %c0_10 = arith.constant 0 : index
    %c0_11 = arith.constant 0 : index
    %14 = vector.load %arg4[%c0_10, %c0_11] : memref<128x128xbf16, #tpu.memory_space<vmem>>, vector<128x128xbf16>
    %c0_12 = arith.constant 0 : index
    %c0_13 = arith.constant 0 : index
    %15 = vector.load %arg9[%c0_12, %c0_13] : memref<8x128xf32, #tpu.memory_space<vmem>>, vector<8x128xf32>
    %c0_14 = arith.constant 0 : index
    %c0_15 = arith.constant 0 : index
    %c0_16 = arith.constant 0 : index
    %16 = vector.load %arg10[%c0_14, %c0_15, %c0_16] : memref<4x8x128xbf16, #tpu.memory_space<vmem>>, vector<1x8x128xbf16>
    %17 = vector.shape_cast %16 : vector<1x8x128xbf16> to vector<8x128xbf16>
    %18 = arith.extf %17 : vector<8x128xbf16> to vector<8x128xf32>
    %19 = arith.truncf %15 : vector<8x128xf32> to vector<8x128xbf16>
    %cst_17 = arith.constant dense<0.000000e+00> : vector<8x128xf32>
    %20 = tpu.matmul %19, %14, %cst_17 {dimension_numbers = #tpu.dot_dimension_numbers<[1], [0], [0], [1], [0, 0, 1, 1], [], []>} : vector<8x128xbf16>, vector<128x128xbf16>, vector<8x128xf32> -> vector<8x128xf32>
    %21 = arith.addf %18, %20 : vector<8x128xf32>
    %22 = math.tanh %21 : vector<8x128xf32>
    %c1 = arith.constant 1 : index
    %c0_18 = arith.constant 0 : index
    %c0_19 = arith.constant 0 : index
    %23 = vector.load %arg10[%c1, %c0_18, %c0_19] : memref<4x8x128xbf16, #tpu.memory_space<vmem>>, vector<1x8x128xbf16>
    %24 = vector.shape_cast %23 : vector<1x8x128xbf16> to vector<8x128xbf16>
    %25 = arith.extf %24 : vector<8x128xbf16> to vector<8x128xf32>
    %26 = arith.truncf %22 : vector<8x128xf32> to vector<8x128xbf16>
    %cst_20 = arith.constant dense<0.000000e+00> : vector<8x128xf32>
    %27 = tpu.matmul %26, %14, %cst_20 {dimension_numbers = #tpu.dot_dimension_numbers<[1], [0], [0], [1], [0, 0, 1, 1], [], []>} : vector<8x128xbf16>, vector<128x128xbf16>, vector<8x128xf32> -> vector<8x128xf32>
    %28 = arith.addf %25, %27 : vector<8x128xf32>
    %29 = math.tanh %28 : vector<8x128xf32>
    %c2 = arith.constant 2 : index
    %c0_21 = arith.constant 0 : index
    %c0_22 = arith.constant 0 : index
    %30 = vector.load %arg10[%c2, %c0_21, %c0_22] : memref<4x8x128xbf16, #tpu.memory_space<vmem>>, vector<1x8x128xbf16>
    %31 = vector.shape_cast %30 : vector<1x8x128xbf16> to vector<8x128xbf16>
    %32 = arith.extf %31 : vector<8x128xbf16> to vector<8x128xf32>
    %33 = arith.truncf %29 : vector<8x128xf32> to vector<8x128xbf16>
    %cst_23 = arith.constant dense<0.000000e+00> : vector<8x128xf32>
    %34 = tpu.matmul %33, %14, %cst_23 {dimension_numbers = #tpu.dot_dimension_numbers<[1], [0], [0], [1], [0, 0, 1, 1], [], []>} : vector<8x128xbf16>, vector<128x128xbf16>, vector<8x128xf32> -> vector<8x128xf32>
    %35 = arith.addf %32, %34 : vector<8x128xf32>
    %36 = math.tanh %35 : vector<8x128xf32>
    %c3 = arith.constant 3 : index
    %c0_24 = arith.constant 0 : index
    %c0_25 = arith.constant 0 : index
    %37 = vector.load %arg10[%c3, %c0_24, %c0_25] : memref<4x8x128xbf16, #tpu.memory_space<vmem>>, vector<1x8x128xbf16>
    %38 = vector.shape_cast %37 : vector<1x8x128xbf16> to vector<8x128xbf16>
    %39 = arith.extf %38 : vector<8x128xbf16> to vector<8x128xf32>
    %40 = arith.truncf %36 : vector<8x128xf32> to vector<8x128xbf16>
    %cst_26 = arith.constant dense<0.000000e+00> : vector<8x128xf32>
    %41 = tpu.matmul %40, %14, %cst_26 {dimension_numbers = #tpu.dot_dimension_numbers<[1], [0], [0], [1], [0, 0, 1, 1], [], []>} : vector<8x128xbf16>, vector<128x128xbf16>, vector<8x128xf32> -> vector<8x128xf32>
    %42 = arith.addf %39, %41 : vector<8x128xf32>
    %43 = math.tanh %42 : vector<8x128xf32>
    %c0_27 = arith.constant 0 : index
    %c0_28 = arith.constant 0 : index
    %44 = vector.load %arg9[%c0_27, %c0_28] : memref<8x128xf32, #tpu.memory_space<vmem>>, vector<8x128xf32>
    tpu.vector_store %arg9[%c0_27, %c0_28], %43 {strides = array<i32>} : memref<8x128xf32, #tpu.memory_space<vmem>>, vector<8x128xf32>,
    %c1_i32 = arith.constant 1 : i32
    %45 = arith.cmpi eq, %arg1, %c1_i32 : i32
    %46 = arith.extui %45 : i1 to i32
    %c0_i32_29 = arith.constant 0 : i32
    %47 = arith.cmpi ne, %46, %c0_i32_29 : i32
    scf.if %47 {
      %c0_30 = arith.constant 0 : index
      %c0_31 = arith.constant 0 : index
      %48 = vector.load %arg9[%c0_30, %c0_31] : memref<8x128xf32, #tpu.memory_space<vmem>>, vector<8x128xf32>
      %c0_32 = arith.constant 0 : index
      %c0_33 = arith.constant 0 : index
      %49 = vector.load %arg6[%c0_32, %c0_33] : memref<1x128xf32, #tpu.memory_space<vmem>>, vector<1x128xf32>
      %50 = vector.broadcast %49 : vector<1x128xf32> to vector<8x128xf32>
      %51 = arith.mulf %48, %50 : vector<8x128xf32>
      %cst_34 = arith.constant dense<0.000000e+00> : vector<8xf32>
      %52 = vector.multi_reduction <add>, %51, %cst_34 [1] : vector<8x128xf32> to vector<8xf32>
      %53 = vector.shape_cast %52 : vector<8xf32> to vector<8x1xf32>
      %c0_35 = arith.constant 0 : index
      %c0_36 = arith.constant 0 : index
      %54 = memref.load %arg7[%c0_35, %c0_36] : memref<1x1xf32, #tpu.memory_space<smem>>
      %55 = vector.broadcast %54 : f32 to vector<8x1xf32>
      %56 = arith.addf %53, %55 : vector<8x1xf32>
      %57 = vector.shape_cast %56 : vector<8x1xf32> to vector<8x1xf32>
      %58 = vector.broadcast %57 : vector<8x1xf32> to vector<8x128xf32>
      %c0_37 = arith.constant 0 : index
      %c0_38 = arith.constant 0 : index
      %59 = vector.load %arg8[%c0_37, %c0_38] : memref<8x128xf32, #tpu.memory_space<vmem>>, vector<8x128xf32>
      tpu.vector_store %arg8[%c0_37, %c0_38], %58 {strides = array<i32>} : memref<8x128xf32, #tpu.memory_space<vmem>>, vector<8x128xf32>,
    } else {
    }
    return
  }
  func.func @transform_0(%arg0: i32, %arg1: i32) -> (i32, i32, i32) {
    %c0_i32 = arith.constant 0 : i32
    %c0_i32_0 = arith.constant 0 : i32
    return %arg1, %arg0, %c0_i32 : i32, i32, i32
  }
  func.func @transform_1(%arg0: i32, %arg1: i32) -> (i32, i32) {
    %c0_i32 = arith.constant 0 : i32
    %c0_i32_0 = arith.constant 0 : i32
    %c0_i32_1 = arith.constant 0 : i32
    return %c0_i32, %c0_i32_0 : i32, i32
  }
  func.func @transform_2(%arg0: i32, %arg1: i32) -> (i32, i32) {
    %c0_i32 = arith.constant 0 : i32
    %c0_i32_0 = arith.constant 0 : i32
    %c0_i32_1 = arith.constant 0 : i32
    return %c0_i32, %c0_i32_0 : i32, i32
  }
  func.func @transform_3(%arg0: i32, %arg1: i32) -> (i32, i32) {
    %c0_i32 = arith.constant 0 : i32
    %c0_i32_0 = arith.constant 0 : i32
    %c0_i32_1 = arith.constant 0 : i32
    return %c0_i32, %c0_i32_0 : i32, i32
  }
  func.func @transform_4(%arg0: i32, %arg1: i32) -> (i32, i32) {
    %c0_i32 = arith.constant 0 : i32
    %c0_i32_0 = arith.constant 0 : i32
    %c0_i32_1 = arith.constant 0 : i32
    return %c0_i32, %c0_i32_0 : i32, i32
  }
  func.func @transform_5(%arg0: i32, %arg1: i32) -> (i32, i32) {
    %c0_i32 = arith.constant 0 : i32
    %c0_i32_0 = arith.constant 0 : i32
    %c0_i32_1 = arith.constant 0 : i32
    return %c0_i32, %c0_i32_0 : i32, i32
  }
  func.func @transform_6(%arg0: i32, %arg1: i32) -> (i32, i32) {
    %c0_i32 = arith.constant 0 : i32
    %c0_i32_0 = arith.constant 0 : i32
    return %arg0, %c0_i32 : i32, i32
  }
}

module attributes {stable_mosaic.version = 11 : i64} {
  func.func @rnn_kernel(%arg0: i32, %arg1: i32, %arg2: memref<4x8x4xbf16, #tpu.memory_space<vmem>>, %arg3: memref<4x128xbf16, #tpu.memory_space<vmem>>, %arg4: memref<128x128xbf16, #tpu.memory_space<vmem>>, %arg5: memref<1x128xf32, #tpu.memory_space<vmem>>, %arg6: memref<1x128xf32, #tpu.memory_space<vmem>>, %arg7: memref<1x1xf32, #tpu.memory_space<smem>>, %arg8: memref<8x128xf32, #tpu.memory_space<vmem>>, %arg9: memref<8x128xf32, #tpu.memory_space<vmem>>, %arg10: memref<4x8x128xbf16, #tpu.memory_space<vmem>>) attributes {dimension_semantics = [#tpu.dimension_semantics<parallel>, #tpu.dimension_semantics<arbitrary>], iteration_bounds = array<i64: 1, 2>, scalar_prefetch = 0 : i64, scratch_operands = 2 : i64, tpu.core_type = #tpu.core_type<tc>, window_params = [{transform_indices = @transform_0, window_bounds = array<i64: 4, 8, 4>}, {pipeline_mode = #tpu.pipeline_mode<synchronous>, transform_indices = @transform_1, window_bounds = array<i64: 4, 128>}, {pipeline_mode = #tpu.pipeline_mode<synchronous>, transform_indices = @transform_2, window_bounds = array<i64: 128, 128>}, {pipeline_mode = #tpu.pipeline_mode<synchronous>, transform_indices = @transform_3, window_bounds = array<i64: 1, 128>}, {pipeline_mode = #tpu.pipeline_mode<synchronous>, transform_indices = @transform_4, window_bounds = array<i64: 1, 128>}, {transform_indices = @transform_5, window_bounds = array<i64: 1, 1>}, {transform_indices = @transform_6, window_bounds = array<i64: 8, 128>}]} {
    %c0_i32 = arith.constant 0 : i32
    %0 = arith.cmpi eq, %arg1, %c0_i32 : i32
    %1 = arith.extui %0 : i1 to i32
    %c0_i32_0 = arith.constant 0 : i32
    %2 = arith.cmpi ne, %1, %c0_i32_0 : i32
    scf.if %2 {
      %cst_30 = arith.constant 0.000000e+00 : f32
      %48 = vector.broadcast %cst_30 : f32 to vector<8x128xf32>
      %c0_31 = arith.constant 0 : index
      %c0_32 = arith.constant 0 : index
      %49 = vector.load %arg9[%c0_31, %c0_32] : memref<8x128xf32, #tpu.memory_space<vmem>>, vector<8x128xf32>
      tpu.vector_store %arg9[%c0_31, %c0_32], %48 {strides = array<i32>} : memref<8x128xf32, #tpu.memory_space<vmem>>, vector<8x128xf32>,
    } else {
    }
    %c0 = arith.constant 0 : index
    %c0_1 = arith.constant 0 : index
    %c0_2 = arith.constant 0 : index
    %3 = vector.load %arg2[%c0, %c0_1, %c0_2] : memref<4x8x4xbf16, #tpu.memory_space<vmem>>, vector<4x8x4xbf16>
    %4 = vector.shape_cast %3 : vector<4x8x4xbf16> to vector<32x4xbf16>
    %c0_3 = arith.constant 0 : index
    %c0_4 = arith.constant 0 : index
    %5 = vector.load %arg3[%c0_3, %c0_4] : memref<4x128xbf16, #tpu.memory_space<vmem>>, vector<4x128xbf16>
    %cst = arith.constant dense<0.000000e+00> : vector<32x128xf32>
    %6 = tpu.matmul %4, %5, %cst {dimension_numbers = #tpu.dot_dimension_numbers<[1], [0], [0], [1], [0, 0, 1, 1], [], []>} : vector<32x4xbf16>, vector<4x128xbf16>, vector<32x128xf32> -> vector<32x128xf32>
    %7 = vector.shape_cast %6 : vector<32x128xf32> to vector<4x8x128xf32>
    %c0_5 = arith.constant 0 : index
    %c0_6 = arith.constant 0 : index
    %8 = vector.load %arg5[%c0_5, %c0_6] : memref<1x128xf32, #tpu.memory_space<vmem>>, vector<1x128xf32>
    %9 = vector.shape_cast %8 : vector<1x128xf32> to vector<1x1x128xf32>
    %10 = vector.broadcast %9 : vector<1x1x128xf32> to vector<4x8x128xf32>
    %11 = arith.addf %7, %10 : vector<4x8x128xf32>
    %12 = arith.truncf %11 : vector<4x8x128xf32> to vector<4x8x128xbf16>
    %c0_7 = arith.constant 0 : index
    %c0_8 = arith.constant 0 : index
    %c0_9 = arith.constant 0 : index
    %13 = vector.load %arg10[%c0_7, %c0_8, %c0_9] : memref<4x8x128xbf16, #tpu.memory_space<vmem>>, vector<4x8x128xbf16>
    tpu.vector_store %arg10[%c0_7, %c0_8, %c0_9], %12 {strides = array<i32>} : memref<4x8x128xbf16, #tpu.memory_space<vmem>>, vector<4x8x128xbf16>,
    %c0_10 = arith.constant 0 : index
    %c0_11 = arith.constant 0 : index
    %14 = vector.load %arg4[%c0_10, %c0_11] : memref<128x128xbf16, #tpu.memory_space<vmem>>, vector<128x128xbf16>
    %c0_12 = arith.constant 0 : index
    %c0_13 = arith.constant 0 : index
    %15 = vector.load %arg9[%c0_12, %c0_13] : memref<8x128xf32, #tpu.memory_space<vmem>>, vector<8x128xf32>
    %c0_14 = arith.constant 0 : index
    %c0_15 = arith.constant 0 : index
    %c0_16 = arith.constant 0 : index
    %16 = vector.load %arg10[%c0_14, %c0_15, %c0_16] : memref<4x8x128xbf16, #tpu.memory_space<vmem>>, vector<1x8x128xbf16>
    %17 = vector.shape_cast %16 : vector<1x8x128xbf16> to vector<8x128xbf16>
    %18 = arith.extf %17 : vector<8x128xbf16> to vector<8x128xf32>
    %19 = arith.truncf %15 : vector<8x128xf32> to vector<8x128xbf16>
    %cst_17 = arith.constant dense<0.000000e+00> : vector<8x128xf32>
    %20 = tpu.matmul %19, %14, %cst_17 {dimension_numbers = #tpu.dot_dimension_numbers<[1], [0], [0], [1], [0, 0, 1, 1], [], []>} : vector<8x128xbf16>, vector<128x128xbf16>, vector<8x128xf32> -> vector<8x128xf32>
    %21 = arith.addf %18, %20 : vector<8x128xf32>
    %22 = math.tanh %21 : vector<8x128xf32>
    %c1 = arith.constant 1 : index
    %c0_18 = arith.constant 0 : index
    %c0_19 = arith.constant 0 : index
    %23 = vector.load %arg10[%c1, %c0_18, %c0_19] : memref<4x8x128xbf16, #tpu.memory_space<vmem>>, vector<1x8x128xbf16>
    %24 = vector.shape_cast %23 : vector<1x8x128xbf16> to vector<8x128xbf16>
    %25 = arith.extf %24 : vector<8x128xbf16> to vector<8x128xf32>
    %26 = arith.truncf %22 : vector<8x128xf32> to vector<8x128xbf16>
    %cst_20 = arith.constant dense<0.000000e+00> : vector<8x128xf32>
    %27 = tpu.matmul %26, %14, %cst_20 {dimension_numbers = #tpu.dot_dimension_numbers<[1], [0], [0], [1], [0, 0, 1, 1], [], []>} : vector<8x128xbf16>, vector<128x128xbf16>, vector<8x128xf32> -> vector<8x128xf32>
    %28 = arith.addf %25, %27 : vector<8x128xf32>
    %29 = math.tanh %28 : vector<8x128xf32>
    %c2 = arith.constant 2 : index
    %c0_21 = arith.constant 0 : index
    %c0_22 = arith.constant 0 : index
    %30 = vector.load %arg10[%c2, %c0_21, %c0_22] : memref<4x8x128xbf16, #tpu.memory_space<vmem>>, vector<1x8x128xbf16>
    %31 = vector.shape_cast %30 : vector<1x8x128xbf16> to vector<8x128xbf16>
    %32 = arith.extf %31 : vector<8x128xbf16> to vector<8x128xf32>
    %33 = arith.truncf %29 : vector<8x128xf32> to vector<8x128xbf16>
    %cst_23 = arith.constant dense<0.000000e+00> : vector<8x128xf32>
    %34 = tpu.matmul %33, %14, %cst_23 {dimension_numbers = #tpu.dot_dimension_numbers<[1], [0], [0], [1], [0, 0, 1, 1], [], []>} : vector<8x128xbf16>, vector<128x128xbf16>, vector<8x128xf32> -> vector<8x128xf32>
    %35 = arith.addf %32, %34 : vector<8x128xf32>
    %36 = math.tanh %35 : vector<8x128xf32>
    %c3 = arith.constant 3 : index
    %c0_24 = arith.constant 0 : index
    %c0_25 = arith.constant 0 : index
    %37 = vector.load %arg10[%c3, %c0_24, %c0_25] : memref<4x8x128xbf16, #tpu.memory_space<vmem>>, vector<1x8x128xbf16>
    %38 = vector.shape_cast %37 : vector<1x8x128xbf16> to vector<8x128xbf16>
    %39 = arith.extf %38 : vector<8x128xbf16> to vector<8x128xf32>
    %40 = arith.truncf %36 : vector<8x128xf32> to vector<8x128xbf16>
    %cst_26 = arith.constant dense<0.000000e+00> : vector<8x128xf32>
    %41 = tpu.matmul %40, %14, %cst_26 {dimension_numbers = #tpu.dot_dimension_numbers<[1], [0], [0], [1], [0, 0, 1, 1], [], []>} : vector<8x128xbf16>, vector<128x128xbf16>, vector<8x128xf32> -> vector<8x128xf32>
    %42 = arith.addf %39, %41 : vector<8x128xf32>
    %43 = math.tanh %42 : vector<8x128xf32>
    %c0_27 = arith.constant 0 : index
    %c0_28 = arith.constant 0 : index
    %44 = vector.load %arg9[%c0_27, %c0_28] : memref<8x128xf32, #tpu.memory_space<vmem>>, vector<8x128xf32>
    tpu.vector_store %arg9[%c0_27, %c0_28], %43 {strides = array<i32>} : memref<8x128xf32, #tpu.memory_space<vmem>>, vector<8x128xf32>,
    %c1_i32 = arith.constant 1 : i32
    %45 = arith.cmpi eq, %arg1, %c1_i32 : i32
    %46 = arith.extui %45 : i1 to i32
    %c0_i32_29 = arith.constant 0 : i32
    %47 = arith.cmpi ne, %46, %c0_i32_29 : i32
    scf.if %47 {
      %c0_30 = arith.constant 0 : index
      %c0_31 = arith.constant 0 : index
      %48 = vector.load %arg9[%c0_30, %c0_31] : memref<8x128xf32, #tpu.memory_space<vmem>>, vector<8x128xf32>
      %c0_32 = arith.constant 0 : index
      %c0_33 = arith.constant 0 : index
      %49 = vector.load %arg6[%c0_32, %c0_33] : memref<1x128xf32, #tpu.memory_space<vmem>>, vector<1x128xf32>
      %50 = vector.broadcast %49 : vector<1x128xf32> to vector<8x128xf32>
      %51 = arith.mulf %48, %50 : vector<8x128xf32>
      %cst_34 = arith.constant dense<0.000000e+00> : vector<8xf32>
      %52 = vector.multi_reduction <add>, %51, %cst_34 [1] : vector<8x128xf32> to vector<8xf32>
      %53 = vector.shape_cast %52 : vector<8xf32> to vector<8x1xf32>
      %c0_35 = arith.constant 0 : index
      %c0_36 = arith.constant 0 : index
      %54 = memref.load %arg7[%c0_35, %c0_36] : memref<1x1xf32, #tpu.memory_space<smem>>
      %55 = vector.broadcast %54 : f32 to vector<8x1xf32>
      %56 = arith.addf %53, %55 : vector<8x1xf32>
      %57 = vector.shape_cast %56 : vector<8x1xf32> to vector<8x1xf32>
      %58 = vector.broadcast %57 : vector<8x1xf32> to vector<8x128xf32>
      %c0_37 = arith.constant 0 : index
      %c0_38 = arith.constant 0 : index
      %59 = vector.load %arg8[%c0_37, %c0_38] : memref<8x128xf32, #tpu.memory_space<vmem>>, vector<8x128xf32>
      tpu.vector_store %arg8[%c0_37, %c0_38], %58 {strides = array<i32>} : memref<8x128xf32, #tpu.memory_space<vmem>>, vector<8x128xf32>,
    } else {
    }
    return
  }
  func.func @transform_0(%arg0: i32, %arg1: i32) -> (i32, i32, i32) {
    %c0_i32 = arith.constant 0 : i32
    %c0_i32_0 = arith.constant 0 : i32
    return %arg1, %arg0, %c0_i32 : i32, i32, i32
  }
  func.func @transform_1(%arg0: i32, %arg1: i32) -> (i32, i32) {
    %c0_i32 = arith.constant 0 : i32
    %c0_i32_0 = arith.constant 0 : i32
    %c0_i32_1 = arith.constant 0 : i32
    return %c0_i32, %c0_i32_0 : i32, i32
  }
  func.func @transform_2(%arg0: i32, %arg1: i32) -> (i32, i32) {
    %c0_i32 = arith.constant 0 : i32
    %c0_i32_0 = arith.constant 0 : i32
    %c0_i32_1 = arith.constant 0 : i32
    return %c0_i32, %c0_i32_0 : i32, i32
  }
  func.func @transform_3(%arg0: i32, %arg1: i32) -> (i32, i32) {
    %c0_i32 = arith.constant 0 : i32
    %c0_i32_0 = arith.constant 0 : i32
    %c0_i32_1 = arith.constant 0 : i32
    return %c0_i32, %c0_i32_0 : i32, i32
  }
  func.func @transform_4(%arg0: i32, %arg1: i32) -> (i32, i32) {
    %c0_i32 = arith.constant 0 : i32
    %c0_i32_0 = arith.constant 0 : i32
    %c0_i32_1 = arith.constant 0 : i32
    return %c0_i32, %c0_i32_0 : i32, i32
  }
  func.func @transform_5(%arg0: i32, %arg1: i32) -> (i32, i32) {
    %c0_i32 = arith.constant 0 : i32
    %c0_i32_0 = arith.constant 0 : i32
    %c0_i32_1 = arith.constant 0 : i32
    return %c0_i32, %c0_i32_0 : i32, i32
  }
  func.func @transform_6(%arg0: i32, %arg1: i32) -> (i32, i32) {
    %c0_i32 = arith.constant 0 : i32
    %c0_i32_0 = arith.constant 0 : i32
    return %arg0, %c0_i32 : i32, i32
  }
}

</mosaic_0001>

<llo_original>
// kernel: tpu_custom_call.1
$region0: #{tpu_custom_call.1}
  #allocation0 [shape = 'u32[]', space=smem, size = 0x4, offset = 0x4, fixed_abs, tag = 'smem constant byte address 0x4 - core index']
  #allocation1 [shape = 'u32[144,128]{1,0:T(1,128)}', space=vmem, size = 0x12000, scoped, tag = 'internal scratch']
  #allocation2 [shape = 'f32[8,128]{1,0:T(8,128)}', space=vmem, size = 0x1000, scoped, tag = 'scratch operand']
  #allocation3 [shape = 'bf16[4,8,128]{2,1,0:T(8,128)(2,1)}', space=vmem, size = 0x2000, scoped, tag = 'scratch operand']
  #allocation4 [shape = 'f32[1,1]{1,0:T(1,128)S(6)}', space=smem, size = 0x200, scoped, tag = 'scoped memory for tpu_custom_call.1']
  %s0 = inlined_call_operand.vmem [shape: bf16[8,8,4], index: 0, kind: input, shape index: {}]
  %s1 = inlined_call_operand.vmem [shape: bf16[4,128], index: 1, kind: input, shape index: {}]
  %s2 = inlined_call_operand.hbm [shape: bf16[128,128], index: 2, kind: input, shape index: {}]
  %s3 = inlined_call_operand.vmem [shape: f32[1,128], index: 3, kind: input, shape index: {}]
  %s4 = inlined_call_operand.vmem [shape: f32[1,128], index: 4, kind: input, shape index: {}]
  %s5 = inlined_call_operand.<no memory space> [shape: f32[1,1], index: 5, kind: input, shape index: {}]
  %s6 = inlined_call_operand.hbm [shape: f32[8,128], index: 6, kind: output, shape index: {}]
  %s7 = sld [smem:[#allocation0]]
  $region69: #{tpu_custom_call.1} parent=0
    _
  %s9 = ssub.s32 1, %s7
  %s10 = scalar_select 0, %s9, %s7
  %11 = sst [smem:[#allocation4]] %s5
  $region1: #{tpu_custom_call.1} parent=0
    #allocation5 [shape = 'u8[32768]{0}', space=vmem, size = 0x8000, scoped, tag = 'input window, operand 2, single buffered']
    #allocation6 [shape = 's32[2]{0}', space=sflag, size = 0x8, scoped, tag = 'scoped memory for tpu_custom_call.1']
    #allocation7 [shape = 's32[2]{0}', space=sflag, size = 0x8, scoped, tag = 'scoped memory for tpu_custom_call.1']
    #allocation8 [shape = 'u8[4096]{0}', space=vmem, size = 0x1000, scoped, tag = 'output window, operand 0, single buffered']
    %12 = vsyncpa [#allocation6], 0
    %13 = vsyncpa [#allocation7], 0
    loop: start=0, step=1, limit=4
    $region2: #{tpu_custom_call.1} parent=1 // loop_pre_header
      _
    $region3: #{tpu_custom_call.1} parent=1 // loop_header
      %s15 = sphi 0, %s19
      %p16 = scmp.ge.s32.totalorder %s15, 4
      %s22 = sphi 0, %s34
      %s23 = sphi 0, %s30
      %s24 = sphi 0, %s22
      %s25 = sphi 0, %s23
      %s26 = sphi 0, %s24
      %s27 = sphi 0, %s25
      %s39 = sphi 0, %s41
      %s42 = sphi 0, %s39
      %s43 = sphi 0, %s42
      %s59 = sphi 0, %s43
      %s63 = sphi 0, %s63
      %s65 = sphi 0, %s63
      %s66 = sphi 0, %s65
      %s80 = sphi 0, %s66
      %s84 = sphi 0, %s84
      %s86 = sphi 0, %s84
      %s87 = sphi 0, %s86
      %s101 = sphi 0, %s87
      %s105 = sphi 0, %s105
      %s107 = sphi 0, %s105
      %s108 = sphi 0, %s107
      %s122 = sphi 0, %s108
      %s126 = sphi 0, %s126
      %s128 = sphi 0, %s126
      %s129 = sphi 0, %s128
      %s143 = sphi 0, %s129
      %s147 = sphi 0, %s147
      %s149 = sphi 0, %s147
      %s150 = sphi 0, %s149
      %s164 = sphi 0, %s150
      %s170 = sphi 0, %s172
      %s173 = sphi 0, %s170
      %s174 = sphi 0, %s173
      %s190 = sphi 0, %s174
    $region4: #{tpu_custom_call.1} parent=1 // loop_header_branch
      %18 = sbr.rel (%p16) target = $region8
    $region5: #{tpu_custom_call.1} parent=1 // loop_body
      %s20 = ssub.s32 %s15, 1
      %s21 = ssub.s32 %s15, 2
      %s28 = sadd.s32 1, %s23
      %p29 = scmp.ge.s32.totalorder %s28, 2
      %s30 = scalar_select %p29, 0, %s28
      %s31 = sadd.s32 1, %s22
      %s32 = scalar_select %p29, %s31, %s22
      %p33 = scmp.ge.s32.totalorder %s32, 1
      %s34 = scalar_select %p33, 0, %s32
      %s35 = ssub.s32 %s23, %s30
      %s36 = ssub.s32 %s22, %s34
      %s37 = sor.u32 %s35, %s36
      %p38 = scmp.eq.s32.totalorder %s37, 0
      %s40 = sadd.s32 %s39, 1
      %s41 = scalar_select %p38, %s39, %s40
      %p44 = pneg %p38
      %p45 = scmp.eq.s32.totalorder %s15, 1
      %p46 = por %p44, %p45
      %p47 = scmp.ne.s32.totalorder %s39, %s42
      %p48 = scmp.eq.s32.totalorder %s15, 0
      %p49 = por %p47, %p48
      %p50 = scmp.ne.s32.totalorder %s39, %s42
      %p51 = scmp.eq.s32.totalorder %s20, 1
      %p52 = por %p50, %p51
      %p53 = scmp.ne.s32.totalorder %s42, %s43
      %p54 = scmp.eq.s32.totalorder %s20, 0
      %p55 = por %p53, %p54
      %p56 = scmp.ne.s32.totalorder %s42, %s43
      %p57 = scmp.eq.s32.totalorder %s21, 1
      %p58 = por %p56, %p57
      %p60 = scmp.ne.s32.totalorder %s43, %s59
      %p61 = scmp.eq.s32.totalorder %s21, 0
      %p62 = por %p60, %p61
      %s64 = sadd.s32 %s63, 1
      %p67 = scmp.eq.s32.totalorder %s15, 1
      %p68 = scmp.ne.s32.totalorder %s63, %s65
      %p69 = scmp.eq.s32.totalorder %s15, 0
      %p70 = por %p68, %p69
      %p71 = scmp.ne.s32.totalorder %s63, %s65
      %p72 = scmp.eq.s32.totalorder %s20, 1
      %p73 = por %p71, %p72
      %p74 = scmp.ne.s32.totalorder %s65, %s66
      %p75 = scmp.eq.s32.totalorder %s20, 0
      %p76 = por %p74, %p75
      %p77 = scmp.ne.s32.totalorder %s65, %s66
      %p78 = scmp.eq.s32.totalorder %s21, 1
      %p79 = por %p77, %p78
      %p81 = scmp.ne.s32.totalorder %s66, %s80
      %p82 = scmp.eq.s32.totalorder %s21, 0
      %p83 = por %p81, %p82
      %s85 = sadd.s32 %s84, 1
      %p88 = scmp.eq.s32.totalorder %s15, 1
      %p89 = scmp.ne.s32.totalorder %s84, %s86
      %p90 = scmp.eq.s32.totalorder %s15, 0
      %p91 = por %p89, %p90
      %p92 = scmp.ne.s32.totalorder %s84, %s86
      %p93 = scmp.eq.s32.totalorder %s20, 1
      %p94 = por %p92, %p93
      %p95 = scmp.ne.s32.totalorder %s86, %s87
      %p96 = scmp.eq.s32.totalorder %s20, 0
      %p97 = por %p95, %p96
      %p98 = scmp.ne.s32.totalorder %s86, %s87
      %p99 = scmp.eq.s32.totalorder %s21, 1
      %p100 = por %p98, %p99
      %p102 = scmp.ne.s32.totalorder %s87, %s101
      %p103 = scmp.eq.s32.totalorder %s21, 0
      %p104 = por %p102, %p103
      %s106 = sadd.s32 %s105, 1
      %p109 = scmp.eq.s32.totalorder %s15, 1
      %p110 = scmp.ne.s32.totalorder %s105, %s107
      %p111 = scmp.eq.s32.totalorder %s15, 0
      %p112 = por %p110, %p111
      %p113 = scmp.ne.s32.totalorder %s105, %s107
      %p114 = scmp.eq.s32.totalorder %s20, 1
      %p115 = por %p113, %p114
      %p116 = scmp.ne.s32.totalorder %s107, %s108
      %p117 = scmp.eq.s32.totalorder %s20, 0
      %p118 = por %p116, %p117
      %p119 = scmp.ne.s32.totalorder %s107, %s108
      %p120 = scmp.eq.s32.totalorder %s21, 1
      %p121 = por %p119, %p120
      %p123 = scmp.ne.s32.totalorder %s108, %s122
      %p124 = scmp.eq.s32.totalorder %s21, 0
      %p125 = por %p123, %p124
      %s127 = sadd.s32 %s126, 1
      %p130 = scmp.eq.s32.totalorder %s15, 1
      %p131 = scmp.ne.s32.totalorder %s126, %s128
      %p132 = scmp.eq.s32.totalorder %s15, 0
      %p133 = por %p131, %p132
      %p134 = scmp.ne.s32.totalorder %s126, %s128
      %p135 = scmp.eq.s32.totalorder %s20, 1
      %p136 = por %p134, %p135
      %p137 = scmp.ne.s32.totalorder %s128, %s129
      %p138 = scmp.eq.s32.totalorder %s20, 0
      %p139 = por %p137, %p138
      %p140 = scmp.ne.s32.totalorder %s128, %s129
      %p141 = scmp.eq.s32.totalorder %s21, 1
      %p142 = por %p140, %p141
      %p144 = scmp.ne.s32.totalorder %s129, %s143
      %p145 = scmp.eq.s32.totalorder %s21, 0
      %p146 = por %p144, %p145
      %s148 = sadd.s32 %s147, 1
      %p151 = scmp.eq.s32.totalorder %s15, 1
      %p152 = scmp.ne.s32.totalorder %s147, %s149
      %p153 = scmp.eq.s32.totalorder %s15, 0
      %p154 = por %p152, %p153
      %p155 = scmp.ne.s32.totalorder %s147, %s149
      %p156 = scmp.eq.s32.totalorder %s20, 1
      %p157 = por %p155, %p156
      %p158 = scmp.ne.s32.totalorder %s149, %s150
      %p159 = scmp.eq.s32.totalorder %s20, 0
      %p160 = por %p158, %p159
      %p161 = scmp.ne.s32.totalorder %s149, %s150
      %p162 = scmp.eq.s32.totalorder %s21, 1
      %p163 = por %p161, %p162
      %p165 = scmp.ne.s32.totalorder %s150, %s164
      %p166 = scmp.eq.s32.totalorder %s21, 0
      %p167 = por %p165, %p166
      %s168 = ssub.s32 %s22, %s34
      %p169 = scmp.eq.s32.totalorder %s168, 0
      %s171 = sadd.s32 %s170, 1
      %s172 = scalar_select %p169, %s170, %s171
      %p175 = pneg %p169
      %p176 = scmp.eq.s32.totalorder %s15, 1
      %p177 = por %p175, %p176
      %p178 = scmp.ne.s32.totalorder %s170, %s173
      %p179 = scmp.eq.s32.totalorder %s15, 0
      %p180 = por %p178, %p179
      %p181 = scmp.ne.s32.totalorder %s170, %s173
      %p182 = scmp.eq.s32.totalorder %s20, 1
      %p183 = por %p181, %p182
      %p184 = scmp.ne.s32.totalorder %s173, %s174
      %p185 = scmp.eq.s32.totalorder %s20, 0
      %p186 = por %p184, %p185
      %p187 = scmp.ne.s32.totalorder %s173, %s174
      %p188 = scmp.eq.s32.totalorder %s21, 1
      %p189 = por %p187, %p188
      %p191 = scmp.ne.s32.totalorder %s174, %s190
      %p192 = scmp.eq.s32.totalorder %s21, 0
      %p193 = por %p191, %p192
      %p194 = scmp.le.s32.totalorder 1, %s15
      %p195 = scmp.lt.s32.totalorder %s15, 3
      %p196 = pnand %p194, %p195
      %p197 = pneg %p196
      // Predicated region
      $region9: #{tpu_custom_call.1} parent=5 // pred_check
        _
      $region10: #{tpu_custom_call.1} parent=5 // pred_check_branch
        %199 = sbr.rel (%p196) target = $region12
      $region11: #{tpu_custom_call.1} parent=5 // pred_region
        %s200 = ssub.s32 %s15, 1
        // Predicated region
        $region13: #{tpu_custom_call.1} parent=11 // pred_check
          %p201 = pneg %p76
        $region14: #{tpu_custom_call.1} parent=11 // pred_check_branch
          %203 = sbr.rel (%p201) target = $region16
        $region15: #{tpu_custom_call.1} parent=11 // pred_region
          _
        $region16: #{tpu_custom_call.1} parent=11 // pred_fallthru
          _
        // Predicated region
        $region17: #{tpu_custom_call.1} parent=11 // pred_check
          %p204 = pneg %p97
        $region18: #{tpu_custom_call.1} parent=11 // pred_check_branch
          %206 = sbr.rel (%p204) target = $region20
        $region19: #{tpu_custom_call.1} parent=11 // pred_region
          %s208 = ssub.s32 1024, 1024
          %209 = vsyncadd [#allocation6], %s208
          %s210 = sshll.u32 [#allocation5], 4
          %s211 = int_to_ptr.vmem [resolvable:$true] %s210
          %216 = dma.hbm_to_vmem [thread:$0]  %s2, 1024, %s211, [#allocation6], 64, 64, 4
        $region20: #{tpu_custom_call.1} parent=11 // pred_fallthru
          _
        // Predicated region
        $region21: #{tpu_custom_call.1} parent=11 // pred_check
          %p217 = pneg %p118
        $region22: #{tpu_custom_call.1} parent=11 // pred_check_branch
          %219 = sbr.rel (%p217) target = $region24
        $region23: #{tpu_custom_call.1} parent=11 // pred_region
          _
        $region24: #{tpu_custom_call.1} parent=11 // pred_fallthru
          _
        // Predicated region
        $region25: #{tpu_custom_call.1} parent=11 // pred_check
          %p220 = pneg %p139
        $region26: #{tpu_custom_call.1} parent=11 // pred_check_branch
          %222 = sbr.rel (%p220) target = $region28
        $region27: #{tpu_custom_call.1} parent=11 // pred_region
          _
        $region28: #{tpu_custom_call.1} parent=11 // pred_fallthru
          _
        // Predicated region
        $region29: #{tpu_custom_call.1} parent=11 // pred_check
          %p223 = pneg %p160
        $region30: #{tpu_custom_call.1} parent=11 // pred_check_branch
          %225 = sbr.rel (%p223) target = $region32
        $region31: #{tpu_custom_call.1} parent=11 // pred_region
          _
        $region32: #{tpu_custom_call.1} parent=11 // pred_fallthru
          _
      $region12: #{tpu_custom_call.1} parent=5 // pred_fallthru
        _
      %p226 = scmp.lt.s32.totalorder %s15, 2
      // Predicated region
      $region33: #{tpu_custom_call.1} parent=5 // pred_check
        %p227 = pneg %p226
      $region34: #{tpu_custom_call.1} parent=5 // pred_check_branch
        %229 = sbr.rel (%p227) target = $region36
      $region35: #{tpu_custom_call.1} parent=5 // pred_region
        // Predicated region
        $region37: #{tpu_custom_call.1} parent=35 // pred_check
          %p230 = pneg %p49
        $region38: #{tpu_custom_call.1} parent=35 // pred_check_branch
          %232 = sbr.rel (%p230) target = $region40
        $region39: #{tpu_custom_call.1} parent=35 // pred_region
          %s233 = smul.u32 4, %s23
          %p234 = scmp.lt.s32.totalorder %s233, 7
          %s235 = scalar_select %p234, %s233, 7
          %p236 = scmp.lt.s32.totalorder %s22, 0
          %s237 = scalar_select %p236, %s22, 0
          %s238 = sadd.s32 %s237, %s235
          %s239 = smul.addr %s238, 4
          %s240 = scalar_lea.vmem %s0, %s239
          %s241 = smul.u32 4, %s23
        $region40: #{tpu_custom_call.1} parent=35 // pred_fallthru
          _
      $region36: #{tpu_custom_call.1} parent=5 // pred_fallthru
        _
      %p242 = scmp.le.s32.totalorder 1, %s15
      %p243 = scmp.lt.s32.totalorder %s15, 3
      %p244 = pnand %p242, %p243
      %p245 = pneg %p244
      // Predicated region
      $region41: #{tpu_custom_call.1} parent=5 // pred_check
        _
      $region42: #{tpu_custom_call.1} parent=5 // pred_check_branch
        %247 = sbr.rel (%p244) target = $region44
      $region43: #{tpu_custom_call.1} parent=5 // pred_region
        %s248 = ssub.s32 %s15, 1
        // Predicated region
        $region45: #{tpu_custom_call.1} parent=43 // pred_check
          %p249 = pneg %p97
        $region46: #{tpu_custom_call.1} parent=43 // pred_check_branch
          %251 = sbr.rel (%p249) target = $region48
        $region47: #{tpu_custom_call.1} parent=43 // pred_region
          %252 = dma.done [#allocation6], 1024
        $region48: #{tpu_custom_call.1} parent=43 // pred_fallthru
          _
        %s253 = smul.u32 4, %s25
        %p254 = scmp.lt.s32.totalorder %s253, 7
        %s255 = scalar_select %p254, %s253, 7
        %p256 = scmp.lt.s32.totalorder %s24, 0
        %s257 = scalar_select %p256, %s24, 0
        %s258 = sadd.s32 %s257, %s255
        %s259 = smul.addr %s258, 4
        %s260 = scalar_lea.vmem %s0, %s259
        %p261 = pneg %p55
        %p262 = pneg %p52
        %p263 = pneg %p76
        %p264 = pneg %p73
        %p265 = pneg %p97
        %p266 = pneg %p94
        %p267 = pneg %p118
        %p268 = pneg %p115
        %p269 = pneg %p139
        %p270 = pneg %p136
        %p271 = pneg %p160
        %p272 = pneg %p157
        %p273 = pneg %p186
        %p274 = pneg %p183
        %s275 = smul.u32 4, %s25
        %p276 = scmp.lt.s32.totalorder %s275, 7
        %s277 = scalar_select %p276, %s275, 7
        %p278 = scmp.lt.s32.totalorder %s24, 0
        %s279 = scalar_select %p278, %s24, 0
        %s280 = sadd.s32 %s279, %s277
        %s281 = smul.addr %s280, 4
        %s282 = scalar_lea.vmem %s0, %s281
        %s283 = smul.u32 4, %s25
        %p285 = scmp.eq.s32.totalorder %s25, 0
        // Predicated region
        $region49: #{tpu_custom_call.1} parent=43 // pred_check
          %p286 = pneg %p285
        $region50: #{tpu_custom_call.1} parent=43 // pred_check_branch
          %288 = sbr.rel (%p286) target = $region52
        $region51: #{tpu_custom_call.1} parent=43 // pred_region
          %289 = vst [vmem:[#allocation2] sm:$0xff] 0.0
        $region52: #{tpu_custom_call.1} parent=43 // pred_fallthru
          _
        %v290 = vld [vmem:[%s282] sm:$0xf]
        %v291 = vld [vmem:[%s282 + $0x4] sm:$0xf]
        %v292 = vld [vmem:[%s282 + $0x8] sm:$0xf]
        %v293 = vld [vmem:[%s282 + $0xc] sm:$0xf]
        %v294 = vld [vmem:[%s1] sm:$0x3]
        %v299 = vunpack.c.l.b16 %v290
        %v300 = vunpack.c.l.b16 %v291
        %v301 = vunpack.c.l.b16 %v292
        %v302 = vunpack.c.l.b16 %v293
        %v303 = vpack.c.b16 %v300, %v299
        %v304 = vpack.c.b16 %v302, %v301
        %vm305 = vcmask 31744
        %v307 = vsel %vm305, %v303, 0
        %v310 = vsel %vm305, %v304, 0
        %vm312 = vcmask 1041408
        %v314 = vsel %vm312, %v294, 0
        %316 = vmatprep.subr.bf16.mxu0 0
        %317 = vmatpush1.bf16.msra.mxu0 %v314
        %318 = vmatprep.subr.bf16.mxu0 0
        %319 = vmatpush1.bf16.msra.mxu0 0
        %320 = vmatprep.subr.bf16.mxu0 0
        %321 = vmatpush1.bf16.msra.mxu0 0
        %322 = vmatprep.subr.bf16.mxu0 0
        %323 = vmatpush1.bf16.msra.mxu0 0
        %324 = vmatprep.subr.bf16.mxu0 0
        %325 = vmatpush1.bf16.msra.mxu0 0
        %326 = vmatprep.subr.bf16.mxu0 0
        %327 = vmatpush1.bf16.msra.mxu0 0
        %328 = vmatprep.subr.bf16.mxu0 0
        %329 = vmatpush1.bf16.msra.mxu0 0
        %330 = vmatprep.subr.bf16.mxu0 0
        %331 = vmatpush1.bf16.msra.mxu0 0
        %332 = vmatprep.subr.bf16.mxu0 0
        %333 = vmatpush1.bf16.msra.mxu0 0
        %334 = vmatprep.subr.bf16.mxu0 0
        %335 = vmatpush1.bf16.msra.mxu0 0
        %336 = vmatprep.subr.bf16.mxu0 0
        %337 = vmatpush1.bf16.msra.mxu0 0
        %338 = vmatprep.subr.bf16.mxu0 0
        %339 = vmatpush1.bf16.msra.mxu0 0
        %340 = vmatprep.subr.bf16.mxu0 0
        %341 = vmatpush1.bf16.msra.mxu0 0
        %342 = vmatprep.subr.bf16.mxu0 0
        %343 = vmatpush1.bf16.msra.mxu0 0
        %344 = vmatprep.subr.bf16.mxu0 0
        %345 = vmatpush1.bf16.msra.mxu0 0
        %346 = vmatprep.subr.bf16.mxu0 0
        %347 = vmatpush1.bf16.msra.mxu0 0
        %348 = vmatprep.mubr.bf16.mxu0 0
        %349 = vmatmul.mubr.bf16.gmra.mrb[0].mxu0 %v307
        %v350 = vpop.f32.mrb[0].mxu0
        %v351 = vadd.f32 0.0, %v350
        %v352 = vpop.f32.mrb[0].mxu0
        %v353 = vpop.f32.mrb[0].mxu0
        %v354 = vadd.f32 0.0, %v353
        %v355 = vpop.f32.mrb[0].mxu0
        %356 = vmatprep.mubr.bf16.mxu0 0
        %357 = vmatmul.mubr.bf16.gmra.mrb[0].mxu0 %v310
        %v358 = vpop.f32.mrb[0].mxu0
        %v359 = vadd.f32 0.0, %v358
        %v360 = vpop.f32.mrb[0].mxu0
        %v361 = vpop.f32.mrb[0].mxu0
        %v362 = vadd.f32 0.0, %v361
        %v363 = vpop.f32.mrb[0].mxu0
        %364 = vdwg.mxu0
        %v365 = vld [vmem:[%s3] sm:$0x1]
        %v367 = vlaneseq
        %v368 = vshrl.u32 %v367, 7
        %v369 = vsub.s32 0, %v368
        %v370 = vrot.slane %v365, %v369
        %v372 = vadd.f32 %v351, %v370
        %v373 = vadd.f32 %v354, %v370
        %v374 = vadd.f32 %v359, %v370
        %v375 = vadd.f32 %v362, %v370
        %v376 = vpack.c.bf16 %v372, %v372
        %v377 = vpack.c.bf16 %v373, %v373
        %v378 = vpack.c.bf16 %v374, %v374
        %v379 = vpack.c.bf16 %v375, %v375
        %380 = vst [vmem:[#allocation3] sm:$0xf] %v376
        %381 = vst [vmem:[#allocation3 + $0x4] sm:$0xf] %v377
        %382 = vst [vmem:[#allocation3 + $0x8] sm:$0xf] %v378
        %383 = vst [vmem:[#allocation3 + $0xc] sm:$0xf] %v379
        %v384 = vld [vmem:[#allocation5] sm:$0xf]
        %v385 = vld [vmem:[#allocation5 + $0x4] sm:$0xf]
        %v386 = vld [vmem:[#allocation5 + $0x8] sm:$0xf]
        %v387 = vld [vmem:[#allocation5 + $0xc] sm:$0xf]
        %v388 = vld [vmem:[#allocation5 + $0x10] sm:$0xf]
        %v389 = vld [vmem:[#allocation5 + $0x14] sm:$0xf]
        %v390 = vld [vmem:[#allocation5 + $0x18] sm:$0xf]
        %v391 = vld [vmem:[#allocation5 + $0x1c] sm:$0xf]
        %v392 = vld [vmem:[#allocation5 + $0x20] sm:$0xf]
        %v393 = vld [vmem:[#allocation5 + $0x24] sm:$0xf]
        %v394 = vld [vmem:[#allocation5 + $0x28] sm:$0xf]
        %v395 = vld [vmem:[#allocation5 + $0x2c] sm:$0xf]
        %v396 = vld [vmem:[#allocation5 + $0x30] sm:$0xf]
        %v397 = vld [vmem:[#allocation5 + $0x34] sm:$0xf]
        %v398 = vld [vmem:[#allocation5 + $0x38] sm:$0xf]
        %v399 = vld [vmem:[#allocation5 + $0x3c] sm:$0xf]
        %v400 = vld [vmem:[#allocation2] sm:$0xff]
        %v401 = vld [vmem:[#allocation3] sm:$0xf]
        %v402 = vunpack.c.l.bf16 %v401
        %v403 = vpack.c.bf16 %v400, %v400
        %v420 = vunpack.c.l.b16 %v384
        %v421 = vunpack.c.l.b16 %v385
        %v422 = vunpack.c.l.b16 %v386
        %v423 = vunpack.c.l.b16 %v387
        %v424 = vunpack.c.l.b16 %v388
        %v425 = vunpack.c.l.b16 %v389
        %v426 = vunpack.c.l.b16 %v390
        %v427 = vunpack.c.l.b16 %v391
        %v428 = vunpack.c.l.b16 %v392
        %v429 = vunpack.c.l.b16 %v393
        %v430 = vunpack.c.l.b16 %v394
        %v431 = vunpack.c.l.b16 %v395
        %v432 = vunpack.c.l.b16 %v396
        %v433 = vunpack.c.l.b16 %v397
        %v434 = vunpack.c.l.b16 %v398
        %v435 = vunpack.c.l.b16 %v399
        %v436 = vpack.c.b16 %v421, %v420
        %v437 = vpack.c.b16 %v423, %v422
        %v438 = vpack.c.b16 %v425, %v424
        %v439 = vpack.c.b16 %v427, %v426
        %v440 = vpack.c.b16 %v429, %v428
        %v441 = vpack.c.b16 %v431, %v430
        %v442 = vpack.c.b16 %v433, %v432
        %v443 = vpack.c.b16 %v435, %v434
        %452 = vmatprep.subr.bf16.mxu0 0
        %453 = vmatpush1.bf16.msra.mxu0 %v436
        %454 = vmatprep.subr.bf16.mxu0 0
        %455 = vmatpush1.bf16.msra.mxu0 %v437
        %456 = vmatprep.subr.bf16.mxu0 0
        %457 = vmatpush1.bf16.msra.mxu0 %v438
        %458 = vmatprep.subr.bf16.mxu0 0
        %459 = vmatpush1.bf16.msra.mxu0 %v439
        %460 = vmatprep.subr.bf16.mxu0 0
        %461 = vmatpush1.bf16.msra.mxu0 %v440
        %462 = vmatprep.subr.bf16.mxu0 0
        %463 = vmatpush1.bf16.msra.mxu0 %v441
        %464 = vmatprep.subr.bf16.mxu0 0
        %465 = vmatpush1.bf16.msra.mxu0 %v442
        %466 = vmatprep.subr.bf16.mxu0 0
        %467 = vmatpush1.bf16.msra.mxu0 %v443
        %468 = vmatprep.subr.bf16.mxu0 0
        %469 = vmatpush1.bf16.msra.mxu0 0
        %470 = vmatprep.subr.bf16.mxu0 0
        %471 = vmatpush1.bf16.msra.mxu0 0
        %472 = vmatprep.subr.bf16.mxu0 0
        %473 = vmatpush1.bf16.msra.mxu0 0
        %474 = vmatprep.subr.bf16.mxu0 0
        %475 = vmatpush1.bf16.msra.mxu0 0
        %476 = vmatprep.subr.bf16.mxu0 0
        %477 = vmatpush1.bf16.msra.mxu0 0
        %478 = vmatprep.subr.bf16.mxu0 0
        %479 = vmatpush1.bf16.msra.mxu0 0
        %480 = vmatprep.subr.bf16.mxu0 0
        %481 = vmatpush1.bf16.msra.mxu0 0
        %482 = vmatprep.subr.bf16.mxu0 0
        %483 = vmatpush1.bf16.msra.mxu0 0
        %484 = vmatprep.mubr.bf16.mxu0 0
        %485 = vmatmul.mubr.bf16.gmra.mrb[0].mxu0 %v403
        %v486 = vpop.f32.mrb[0].mxu0
        %v487 = vadd.f32 0.0, %v486
        %v488 = vpop.f32.mrb[0].mxu0
        %v489 = vpop.f32.mrb[0].mxu0
        %v490 = vpop.f32.mrb[0].mxu0
        %491 = vdwg.mxu0
        %v492 = vadd.f32 %v402, %v487
        %v493 = vtanh.pop %v492
        %s494 = scalar_lea.vmem [#allocation3], 4
        %v495 = vld [vmem:[%s494] sm:$0xf]
        %v496 = vunpack.c.l.bf16 %v495
        %v497 = vpack.c.bf16 %v493, %v493
        %498 = vmatprep.subr.bf16.mxu0 0
        %499 = vmatpush1.bf16.msra.mxu0 %v436
        %500 = vmatprep.subr.bf16.mxu0 0
        %501 = vmatpush1.bf16.msra.mxu0 %v437
        %502 = vmatprep.subr.bf16.mxu0 0
        %503 = vmatpush1.bf16.msra.mxu0 %v438
        %504 = vmatprep.subr.bf16.mxu0 0
        %505 = vmatpush1.bf16.msra.mxu0 %v439
        %506 = vmatprep.subr.bf16.mxu0 0
        %507 = vmatpush1.bf16.msra.mxu0 %v440
        %508 = vmatprep.subr.bf16.mxu0 0
        %509 = vmatpush1.bf16.msra.mxu0 %v441
        %510 = vmatprep.subr.bf16.mxu0 0
        %511 = vmatpush1.bf16.msra.mxu0 %v442
        %512 = vmatprep.subr.bf16.mxu0 0
        %513 = vmatpush1.bf16.msra.mxu0 %v443
        %514 = vmatprep.subr.bf16.mxu0 0
        %515 = vmatpush1.bf16.msra.mxu0 0
        %516 = vmatprep.subr.bf16.mxu0 0
        %517 = vmatpush1.bf16.msra.mxu0 0
        %518 = vmatprep.subr.bf16.mxu0 0
        %519 = vmatpush1.bf16.msra.mxu0 0
        %520 = vmatprep.subr.bf16.mxu0 0
        %521 = vmatpush1.bf16.msra.mxu0 0
        %522 = vmatprep.subr.bf16.mxu0 0
        %523 = vmatpush1.bf16.msra.mxu0 0
        %524 = vmatprep.subr.bf16.mxu0 0
        %525 = vmatpush1.bf16.msra.mxu0 0
        %526 = vmatprep.subr.bf16.mxu0 0
        %527 = vmatpush1.bf16.msra.mxu0 0
        %528 = vmatprep.subr.bf16.mxu0 0
        %529 = vmatpush1.bf16.msra.mxu0 0
        %530 = vmatprep.mubr.bf16.mxu0 0
        %531 = vmatmul.mubr.bf16.gmra.mrb[0].mxu0 %v497
        %v532 = vpop.f32.mrb[0].mxu0
        %v533 = vadd.f32 0.0, %v532
        %v534 = vpop.f32.mrb[0].mxu0
        %v535 = vpop.f32.mrb[0].mxu0
        %v536 = vpop.f32.mrb[0].mxu0
        %537 = vdwg.mxu0
        %v538 = vadd.f32 %v496, %v533
        %v539 = vtanh.pop %v538
        %s540 = scalar_lea.vmem [#allocation3], 8
        %v541 = vld [vmem:[%s540] sm:$0xf]
        %v542 = vunpack.c.l.bf16 %v541
        %v543 = vpack.c.bf16 %v539, %v539
        %544 = vmatprep.subr.bf16.mxu0 0
        %545 = vmatpush1.bf16.msra.mxu0 %v436
        %546 = vmatprep.subr.bf16.mxu0 0
        %547 = vmatpush1.bf16.msra.mxu0 %v437
        %548 = vmatprep.subr.bf16.mxu0 0
        %549 = vmatpush1.bf16.msra.mxu0 %v438
        %550 = vmatprep.subr.bf16.mxu0 0
        %551 = vmatpush1.bf16.msra.mxu0 %v439
        %552 = vmatprep.subr.bf16.mxu0 0
        %553 = vmatpush1.bf16.msra.mxu0 %v440
        %554 = vmatprep.subr.bf16.mxu0 0
        %555 = vmatpush1.bf16.msra.mxu0 %v441
        %556 = vmatprep.subr.bf16.mxu0 0
        %557 = vmatpush1.bf16.msra.mxu0 %v442
        %558 = vmatprep.subr.bf16.mxu0 0
        %559 = vmatpush1.bf16.msra.mxu0 %v443
        %560 = vmatprep.subr.bf16.mxu0 0
        %561 = vmatpush1.bf16.msra.mxu0 0
        %562 = vmatprep.subr.bf16.mxu0 0
        %563 = vmatpush1.bf16.msra.mxu0 0
        %564 = vmatprep.subr.bf16.mxu0 0
        %565 = vmatpush1.bf16.msra.mxu0 0
        %566 = vmatprep.subr.bf16.mxu0 0
        %567 = vmatpush1.bf16.msra.mxu0 0
        %568 = vmatprep.subr.bf16.mxu0 0
        %569 = vmatpush1.bf16.msra.mxu0 0
        %570 = vmatprep.subr.bf16.mxu0 0
        %571 = vmatpush1.bf16.msra.mxu0 0
        %572 = vmatprep.subr.bf16.mxu0 0
        %573 = vmatpush1.bf16.msra.mxu0 0
        %574 = vmatprep.subr.bf16.mxu0 0
        %575 = vmatpush1.bf16.msra.mxu0 0
        %576 = vmatprep.mubr.bf16.mxu0 0
        %577 = vmatmul.mubr.bf16.gmra.mrb[0].mxu0 %v543
        %v578 = vpop.f32.mrb[0].mxu0
        %v579 = vadd.f32 0.0, %v578
        %v580 = vpop.f32.mrb[0].mxu0
        %v581 = vpop.f32.mrb[0].mxu0
        %v582 = vpop.f32.mrb[0].mxu0
        %583 = vdwg.mxu0
        %v584 = vadd.f32 %v542, %v579
        %v585 = vtanh.pop %v584
        %s586 = scalar_lea.vmem [#allocation3], 12
        %v587 = vld [vmem:[%s586] sm:$0xf]
        %v588 = vunpack.c.l.bf16 %v587
        %v589 = vpack.c.bf16 %v585, %v585
        %590 = vmatprep.subr.bf16.mxu0 0
        %591 = vmatpush1.bf16.msra.mxu0 %v436
        %592 = vmatprep.subr.bf16.mxu0 0
        %593 = vmatpush1.bf16.msra.mxu0 %v437
        %594 = vmatprep.subr.bf16.mxu0 0
        %595 = vmatpush1.bf16.msra.mxu0 %v438
        %596 = vmatprep.subr.bf16.mxu0 0
        %597 = vmatpush1.bf16.msra.mxu0 %v439
        %598 = vmatprep.subr.bf16.mxu0 0
        %599 = vmatpush1.bf16.msra.mxu0 %v440
        %600 = vmatprep.subr.bf16.mxu0 0
        %601 = vmatpush1.bf16.msra.mxu0 %v441
        %602 = vmatprep.subr.bf16.mxu0 0
        %603 = vmatpush1.bf16.msra.mxu0 %v442
        %604 = vmatprep.subr.bf16.mxu0 0
        %605 = vmatpush1.bf16.msra.mxu0 %v443
        %606 = vmatprep.subr.bf16.mxu0 0
        %607 = vmatpush1.bf16.msra.mxu0 0
        %608 = vmatprep.subr.bf16.mxu0 0
        %609 = vmatpush1.bf16.msra.mxu0 0
        %610 = vmatprep.subr.bf16.mxu0 0
        %611 = vmatpush1.bf16.msra.mxu0 0
        %612 = vmatprep.subr.bf16.mxu0 0
        %613 = vmatpush1.bf16.msra.mxu0 0
        %614 = vmatprep.subr.bf16.mxu0 0
        %615 = vmatpush1.bf16.msra.mxu0 0
        %616 = vmatprep.subr.bf16.mxu0 0
        %617 = vmatpush1.bf16.msra.mxu0 0
        %618 = vmatprep.subr.bf16.mxu0 0
        %619 = vmatpush1.bf16.msra.mxu0 0
        %620 = vmatprep.subr.bf16.mxu0 0
        %621 = vmatpush1.bf16.msra.mxu0 0
        %622 = vmatprep.mubr.bf16.mxu0 0
        %623 = vmatmul.mubr.bf16.gmra.mrb[0].mxu0 %v589
        %v624 = vpop.f32.mrb[0].mxu0
        %v625 = vadd.f32 0.0, %v624
        %v626 = vpop.f32.mrb[0].mxu0
        %v627 = vpop.f32.mrb[0].mxu0
        %v628 = vpop.f32.mrb[0].mxu0
        %629 = vdwg.mxu0
        %v630 = vadd.f32 %v588, %v625
        %v631 = vtanh.pop %v630
        %632 = vst [vmem:[#allocation2] sm:$0xff] %v631
        %p633 = scmp.eq.s32.totalorder %s25, 1
        // Predicated region
        $region53: #{tpu_custom_call.1} parent=43 // pred_check
          %p634 = pneg %p633
        $region54: #{tpu_custom_call.1} parent=43 // pred_check_branch
          %636 = sbr.rel (%p634) target = $region56
        $region55: #{tpu_custom_call.1} parent=43 // pred_region
          %v637 = vld [vmem:[#allocation2] sm:$0xff]
          %v638 = vld [vmem:[%s4] sm:$0x1]
          %v640 = vlaneseq
          %v641 = vshrl.u32 %v640, 7
          %v642 = vsub.s32 0, %v641
          %v643 = vrot.slane %v638, %v642
          %v645 = vmul.f32 %v637, %v643
          %646 = vadd.xlane.f32.xlu0 %v645
          %v647 = vpop.xlane.xlu0 %646
          %s648 = sld [smem:[#allocation4]]
          %v649 = vstv %s648
          %v650 = vadd.f32 %v647, %v649
          %651 = vst [vmem:[#allocation8] sm:$0xff] %v650
        $region56: #{tpu_custom_call.1} parent=43 // pred_fallthru
          _
        // Predicated region
        $region57: #{tpu_custom_call.1} parent=43 // pred_check
          %p652 = pneg %p183
        $region58: #{tpu_custom_call.1} parent=43 // pred_check_branch
          %654 = sbr.rel (%p652) target = $region60
        $region59: #{tpu_custom_call.1} parent=43 // pred_region
          %s656 = ssub.s32 128, 128
          %657 = vsyncadd [#allocation7], %s656
          %s658 = smul.addr %s24, 128
          %s659 = scalar_lea.hbm %s6, %s658
          %s661 = sshll.u32 [#allocation8], 4
          %s662 = int_to_ptr.vmem [resolvable:$true] %s661
          %664 = dma.vmem_to_hbm [thread:$0]  %s662, 128, %s659, [#allocation7]
        $region60: #{tpu_custom_call.1} parent=43 // pred_fallthru
          _
        // Predicated region
        $region61: #{tpu_custom_call.1} parent=43 // pred_check
          %p665 = pneg %p183
        $region62: #{tpu_custom_call.1} parent=43 // pred_check_branch
          %667 = sbr.rel (%p665) target = $region64
        $region63: #{tpu_custom_call.1} parent=43 // pred_region
          %668 = dma.done [#allocation7], 128
        $region64: #{tpu_custom_call.1} parent=43 // pred_fallthru
          _
      $region44: #{tpu_custom_call.1} parent=5 // pred_fallthru
        _
      %p669 = scmp.le.s32.totalorder 2, %s15
      // Predicated region
      $region65: #{tpu_custom_call.1} parent=5 // pred_check
        %p670 = pneg %p669
      $region66: #{tpu_custom_call.1} parent=5 // pred_check_branch
        %672 = sbr.rel (%p670) target = $region68
      $region67: #{tpu_custom_call.1} parent=5 // pred_region
        %s673 = ssub.s32 %s15, 2
      $region68: #{tpu_custom_call.1} parent=5 // pred_fallthru
        _
    $region6: #{tpu_custom_call.1} parent=1 // loop_footer
      %s19 = sadd.s32 1, %s15
    $region7: #{tpu_custom_call.1} parent=1 // loop_footer_branch
      %14 = sbr.rel target = $region3
    $region8: #{tpu_custom_call.1} parent=1 // loop_exit
      _
    %674 = vsyncpa [#allocation6], 1
    %s675 = scalar_lea.sflag [#allocation6], 1
    %676 = vsyncpa %s675, 1
    %677 = vsyncpa [#allocation7], 1
    %s678 = scalar_lea.sflag [#allocation7], 1
    %679 = vsyncpa %s678, 1

// kernel: tpu_custom_call.1
$region0: #{tpu_custom_call.1}
  #allocation0 [shape = 'u32[]', space=smem, size = 0x4, offset = 0x4, fixed_abs, tag = 'smem constant byte address 0x4 - core index']
  #allocation1 [shape = 'u32[144,128]{1,0:T(1,128)}', space=vmem, size = 0x12000, scoped, tag = 'internal scratch']
  #allocation2 [shape = 'f32[8,128]{1,0:T(8,128)}', space=vmem, size = 0x1000, scoped, tag = 'scratch operand']
  #allocation3 [shape = 'bf16[4,8,128]{2,1,0:T(8,128)(2,1)}', space=vmem, size = 0x2000, scoped, tag = 'scratch operand']
  #allocation4 [shape = 'f32[1,1]{1,0:T(1,128)S(6)}', space=smem, size = 0x200, scoped, tag = 'scoped memory for tpu_custom_call.1']
  %s0 = inlined_call_operand.vmem [shape: bf16[8,8,4], index: 0, kind: input, shape index: {}]
  %s1 = inlined_call_operand.vmem [shape: bf16[4,128], index: 1, kind: input, shape index: {}]
  %s2 = inlined_call_operand.hbm [shape: bf16[128,128], index: 2, kind: input, shape index: {}]
  %s3 = inlined_call_operand.vmem [shape: f32[1,128], index: 3, kind: input, shape index: {}]
  %s4 = inlined_call_operand.vmem [shape: f32[1,128], index: 4, kind: input, shape index: {}]
  %s5 = inlined_call_operand.<no memory space> [shape: f32[1,1], index: 5, kind: input, shape index: {}]
  %s6 = inlined_call_operand.hbm [shape: f32[8,128], index: 6, kind: output, shape index: {}]
  %s7 = sld [smem:[#allocation0]]
  $region69: #{tpu_custom_call.1} parent=0
    _
  %s9 = ssub.s32 1, %s7
  %s10 = scalar_select 0, %s9, %s7
  %11 = sst [smem:[#allocation4]] %s5
  $region1: #{tpu_custom_call.1} parent=0
    #allocation5 [shape = 'u8[32768]{0}', space=vmem, size = 0x8000, scoped, tag = 'input window, operand 2, single buffered']
    #allocation6 [shape = 's32[2]{0}', space=sflag, size = 0x8, scoped, tag = 'scoped memory for tpu_custom_call.1']
    #allocation7 [shape = 's32[2]{0}', space=sflag, size = 0x8, scoped, tag = 'scoped memory for tpu_custom_call.1']
    #allocation8 [shape = 'u8[4096]{0}', space=vmem, size = 0x1000, scoped, tag = 'output window, operand 0, single buffered']
    %12 = vsyncpa [#allocation6], 0
    %13 = vsyncpa [#allocation7], 0
    loop: start=0, step=1, limit=4
    $region2: #{tpu_custom_call.1} parent=1 // loop_pre_header
      _
    $region3: #{tpu_custom_call.1} parent=1 // loop_header
      %s15 = sphi 0, %s19
      %p16 = scmp.ge.s32.totalorder %s15, 4
      %s22 = sphi 0, %s34
      %s23 = sphi 0, %s30
      %s24 = sphi 0, %s22
      %s25 = sphi 0, %s23
      %s26 = sphi 0, %s24
      %s27 = sphi 0, %s25
      %s39 = sphi 0, %s41
      %s42 = sphi 0, %s39
      %s43 = sphi 0, %s42
      %s59 = sphi 0, %s43
      %s63 = sphi 0, %s63
      %s65 = sphi 0, %s63
      %s66 = sphi 0, %s65
      %s80 = sphi 0, %s66
      %s84 = sphi 0, %s84
      %s86 = sphi 0, %s84
      %s87 = sphi 0, %s86
      %s101 = sphi 0, %s87
      %s105 = sphi 0, %s105
      %s107 = sphi 0, %s105
      %s108 = sphi 0, %s107
      %s122 = sphi 0, %s108
      %s126 = sphi 0, %s126
      %s128 = sphi 0, %s126
      %s129 = sphi 0, %s128
      %s143 = sphi 0, %s129
      %s147 = sphi 0, %s147
      %s149 = sphi 0, %s147
      %s150 = sphi 0, %s149
      %s164 = sphi 0, %s150
      %s170 = sphi 0, %s172
      %s173 = sphi 0, %s170
      %s174 = sphi 0, %s173
      %s190 = sphi 0, %s174
    $region4: #{tpu_custom_call.1} parent=1 // loop_header_branch
      %18 = sbr.rel (%p16) target = $region8
    $region5: #{tpu_custom_call.1} parent=1 // loop_body
      %s20 = ssub.s32 %s15, 1
      %s21 = ssub.s32 %s15, 2
      %s28 = sadd.s32 1, %s23
      %p29 = scmp.ge.s32.totalorder %s28, 2
      %s30 = scalar_select %p29, 0, %s28
      %s31 = sadd.s32 1, %s22
      %s32 = scalar_select %p29, %s31, %s22
      %p33 = scmp.ge.s32.totalorder %s32, 1
      %s34 = scalar_select %p33, 0, %s32
      %s35 = ssub.s32 %s23, %s30
      %s36 = ssub.s32 %s22, %s34
      %s37 = sor.u32 %s35, %s36
      %p38 = scmp.eq.s32.totalorder %s37, 0
      %s40 = sadd.s32 %s39, 1
      %s41 = scalar_select %p38, %s39, %s40
      %p44 = pneg %p38
      %p45 = scmp.eq.s32.totalorder %s15, 1
      %p46 = por %p44, %p45
      %p47 = scmp.ne.s32.totalorder %s39, %s42
      %p48 = scmp.eq.s32.totalorder %s15, 0
      %p49 = por %p47, %p48
      %p50 = scmp.ne.s32.totalorder %s39, %s42
      %p51 = scmp.eq.s32.totalorder %s20, 1
      %p52 = por %p50, %p51
      %p53 = scmp.ne.s32.totalorder %s42, %s43
      %p54 = scmp.eq.s32.totalorder %s20, 0
      %p55 = por %p53, %p54
      %p56 = scmp.ne.s32.totalorder %s42, %s43
      %p57 = scmp.eq.s32.totalorder %s21, 1
      %p58 = por %p56, %p57
      %p60 = scmp.ne.s32.totalorder %s43, %s59
      %p61 = scmp.eq.s32.totalorder %s21, 0
      %p62 = por %p60, %p61
      %s64 = sadd.s32 %s63, 1
      %p67 = scmp.eq.s32.totalorder %s15, 1
      %p68 = scmp.ne.s32.totalorder %s63, %s65
      %p69 = scmp.eq.s32.totalorder %s15, 0
      %p70 = por %p68, %p69
      %p71 = scmp.ne.s32.totalorder %s63, %s65
      %p72 = scmp.eq.s32.totalorder %s20, 1
      %p73 = por %p71, %p72
      %p74 = scmp.ne.s32.totalorder %s65, %s66
      %p75 = scmp.eq.s32.totalorder %s20, 0
      %p76 = por %p74, %p75
      %p77 = scmp.ne.s32.totalorder %s65, %s66
      %p78 = scmp.eq.s32.totalorder %s21, 1
      %p79 = por %p77, %p78
      %p81 = scmp.ne.s32.totalorder %s66, %s80
      %p82 = scmp.eq.s32.totalorder %s21, 0
      %p83 = por %p81, %p82
      %s85 = sadd.s32 %s84, 1
      %p88 = scmp.eq.s32.totalorder %s15, 1
      %p89 = scmp.ne.s32.totalorder %s84, %s86
      %p90 = scmp.eq.s32.totalorder %s15, 0
      %p91 = por %p89, %p90
      %p92 = scmp.ne.s32.totalorder %s84, %s86
      %p93 = scmp.eq.s32.totalorder %s20, 1
      %p94 = por %p92, %p93
      %p95 = scmp.ne.s32.totalorder %s86, %s87
      %p96 = scmp.eq.s32.totalorder %s20, 0
      %p97 = por %p95, %p96
      %p98 = scmp.ne.s32.totalorder %s86, %s87
      %p99 = scmp.eq.s32.totalorder %s21, 1
      %p100 = por %p98, %p99
      %p102 = scmp.ne.s32.totalorder %s87, %s101
      %p103 = scmp.eq.s32.totalorder %s21, 0
      %p104 = por %p102, %p103
      %s106 = sadd.s32 %s105, 1
      %p109 = scmp.eq.s32.totalorder %s15, 1
      %p110 = scmp.ne.s32.totalorder %s105, %s107
      %p111 = scmp.eq.s32.totalorder %s15, 0
      %p112 = por %p110, %p111
      %p113 = scmp.ne.s32.totalorder %s105, %s107
      %p114 = scmp.eq.s32.totalorder %s20, 1
      %p115 = por %p113, %p114
      %p116 = scmp.ne.s32.totalorder %s107, %s108
      %p117 = scmp.eq.s32.totalorder %s20, 0
      %p118 = por %p116, %p117
      %p119 = scmp.ne.s32.totalorder %s107, %s108
      %p120 = scmp.eq.s32.totalorder %s21, 1
      %p121 = por %p119, %p120
      %p123 = scmp.ne.s32.totalorder %s108, %s122
      %p124 = scmp.eq.s32.totalorder %s21, 0
      %p125 = por %p123, %p124
      %s127 = sadd.s32 %s126, 1
      %p130 = scmp.eq.s32.totalorder %s15, 1
      %p131 = scmp.ne.s32.totalorder %s126, %s128
      %p132 = scmp.eq.s32.totalorder %s15, 0
      %p133 = por %p131, %p132
      %p134 = scmp.ne.s32.totalorder %s126, %s128
      %p135 = scmp.eq.s32.totalorder %s20, 1
      %p136 = por %p134, %p135
      %p137 = scmp.ne.s32.totalorder %s128, %s129
      %p138 = scmp.eq.s32.totalorder %s20, 0
      %p139 = por %p137, %p138
      %p140 = scmp.ne.s32.totalorder %s128, %s129
      %p141 = scmp.eq.s32.totalorder %s21, 1
      %p142 = por %p140, %p141
      %p144 = scmp.ne.s32.totalorder %s129, %s143
      %p145 = scmp.eq.s32.totalorder %s21, 0
      %p146 = por %p144, %p145
      %s148 = sadd.s32 %s147, 1
      %p151 = scmp.eq.s32.totalorder %s15, 1
      %p152 = scmp.ne.s32.totalorder %s147, %s149
      %p153 = scmp.eq.s32.totalorder %s15, 0
      %p154 = por %p152, %p153
      %p155 = scmp.ne.s32.totalorder %s147, %s149
      %p156 = scmp.eq.s32.totalorder %s20, 1
      %p157 = por %p155, %p156
      %p158 = scmp.ne.s32.totalorder %s149, %s150
      %p159 = scmp.eq.s32.totalorder %s20, 0
      %p160 = por %p158, %p159
      %p161 = scmp.ne.s32.totalorder %s149, %s150
      %p162 = scmp.eq.s32.totalorder %s21, 1
      %p163 = por %p161, %p162
      %p165 = scmp.ne.s32.totalorder %s150, %s164
      %p166 = scmp.eq.s32.totalorder %s21, 0
      %p167 = por %p165, %p166
      %s168 = ssub.s32 %s22, %s34
      %p169 = scmp.eq.s32.totalorder %s168, 0
      %s171 = sadd.s32 %s170, 1
      %s172 = scalar_select %p169, %s170, %s171
      %p175 = pneg %p169
      %p176 = scmp.eq.s32.totalorder %s15, 1
      %p177 = por %p175, %p176
      %p178 = scmp.ne.s32.totalorder %s170, %s173
      %p179 = scmp.eq.s32.totalorder %s15, 0
      %p180 = por %p178, %p179
      %p181 = scmp.ne.s32.totalorder %s170, %s173
      %p182 = scmp.eq.s32.totalorder %s20, 1
      %p183 = por %p181, %p182
      %p184 = scmp.ne.s32.totalorder %s173, %s174
      %p185 = scmp.eq.s32.totalorder %s20, 0
      %p186 = por %p184, %p185
      %p187 = scmp.ne.s32.totalorder %s173, %s174
      %p188 = scmp.eq.s32.totalorder %s21, 1
      %p189 = por %p187, %p188
      %p191 = scmp.ne.s32.totalorder %s174, %s190
      %p192 = scmp.eq.s32.totalorder %s21, 0
      %p193 = por %p191, %p192
      %p194 = scmp.le.s32.totalorder 1, %s15
      %p195 = scmp.lt.s32.totalorder %s15, 3
      %p196 = pnand %p194, %p195
      %p197 = pneg %p196
      // Predicated region
      $region9: #{tpu_custom_call.1} parent=5 // pred_check
        _
      $region10: #{tpu_custom_call.1} parent=5 // pred_check_branch
        %199 = sbr.rel (%p196) target = $region12
      $region11: #{tpu_custom_call.1} parent=5 // pred_region
        %s200 = ssub.s32 %s15, 1
        // Predicated region
        $region13: #{tpu_custom_call.1} parent=11 // pred_check
          %p201 = pneg %p76
        $region14: #{tpu_custom_call.1} parent=11 // pred_check_branch
          %203 = sbr.rel (%p201) target = $region16
        $region15: #{tpu_custom_call.1} parent=11 // pred_region
          _
        $region16: #{tpu_custom_call.1} parent=11 // pred_fallthru
          _
        // Predicated region
        $region17: #{tpu_custom_call.1} parent=11 // pred_check
          %p204 = pneg %p97
        $region18: #{tpu_custom_call.1} parent=11 // pred_check_branch
          %206 = sbr.rel (%p204) target = $region20
        $region19: #{tpu_custom_call.1} parent=11 // pred_region
          %s208 = ssub.s32 1024, 1024
          %209 = vsyncadd [#allocation6], %s208
          %s210 = sshll.u32 [#allocation5], 4
          %s211 = int_to_ptr.vmem [resolvable:$true] %s210
          %216 = dma.hbm_to_vmem [thread:$0]  %s2, 1024, %s211, [#allocation6], 64, 64, 4
        $region20: #{tpu_custom_call.1} parent=11 // pred_fallthru
          _
        // Predicated region
        $region21: #{tpu_custom_call.1} parent=11 // pred_check
          %p217 = pneg %p118
        $region22: #{tpu_custom_call.1} parent=11 // pred_check_branch
          %219 = sbr.rel (%p217) target = $region24
        $region23: #{tpu_custom_call.1} parent=11 // pred_region
          _
        $region24: #{tpu_custom_call.1} parent=11 // pred_fallthru
          _
        // Predicated region
        $region25: #{tpu_custom_call.1} parent=11 // pred_check
          %p220 = pneg %p139
        $region26: #{tpu_custom_call.1} parent=11 // pred_check_branch
          %222 = sbr.rel (%p220) target = $region28
        $region27: #{tpu_custom_call.1} parent=11 // pred_region
          _
        $region28: #{tpu_custom_call.1} parent=11 // pred_fallthru
          _
        // Predicated region
        $region29: #{tpu_custom_call.1} parent=11 // pred_check
          %p223 = pneg %p160
        $region30: #{tpu_custom_call.1} parent=11 // pred_check_branch
          %225 = sbr.rel (%p223) target = $region32
        $region31: #{tpu_custom_call.1} parent=11 // pred_region
          _
        $region32: #{tpu_custom_call.1} parent=11 // pred_fallthru
          _
      $region12: #{tpu_custom_call.1} parent=5 // pred_fallthru
        _
      %p226 = scmp.lt.s32.totalorder %s15, 2
      // Predicated region
      $region33: #{tpu_custom_call.1} parent=5 // pred_check
        %p227 = pneg %p226
      $region34: #{tpu_custom_call.1} parent=5 // pred_check_branch
        %229 = sbr.rel (%p227) target = $region36
      $region35: #{tpu_custom_call.1} parent=5 // pred_region
        // Predicated region
        $region37: #{tpu_custom_call.1} parent=35 // pred_check
          %p230 = pneg %p49
        $region38: #{tpu_custom_call.1} parent=35 // pred_check_branch
          %232 = sbr.rel (%p230) target = $region40
        $region39: #{tpu_custom_call.1} parent=35 // pred_region
          %s233 = smul.u32 4, %s23
          %p234 = scmp.lt.s32.totalorder %s233, 7
          %s235 = scalar_select %p234, %s233, 7
          %p236 = scmp.lt.s32.totalorder %s22, 0
          %s237 = scalar_select %p236, %s22, 0
          %s238 = sadd.s32 %s237, %s235
          %s239 = smul.addr %s238, 4
          %s240 = scalar_lea.vmem %s0, %s239
          %s241 = smul.u32 4, %s23
        $region40: #{tpu_custom_call.1} parent=35 // pred_fallthru
          _
      $region36: #{tpu_custom_call.1} parent=5 // pred_fallthru
        _
      %p242 = scmp.le.s32.totalorder 1, %s15
      %p243 = scmp.lt.s32.totalorder %s15, 3
      %p244 = pnand %p242, %p243
      %p245 = pneg %p244
      // Predicated region
      $region41: #{tpu_custom_call.1} parent=5 // pred_check
        _
      $region42: #{tpu_custom_call.1} parent=5 // pred_check_branch
        %247 = sbr.rel (%p244) target = $region44
      $region43: #{tpu_custom_call.1} parent=5 // pred_region
        %s248 = ssub.s32 %s15, 1
        // Predicated region
        $region45: #{tpu_custom_call.1} parent=43 // pred_check
          %p249 = pneg %p97
        $region46: #{tpu_custom_call.1} parent=43 // pred_check_branch
          %251 = sbr.rel (%p249) target = $region48
        $region47: #{tpu_custom_call.1} parent=43 // pred_region
          %252 = dma.done [#allocation6], 1024
        $region48: #{tpu_custom_call.1} parent=43 // pred_fallthru
          _
        %s253 = smul.u32 4, %s25
        %p254 = scmp.lt.s32.totalorder %s253, 7
        %s255 = scalar_select %p254, %s253, 7
        %p256 = scmp.lt.s32.totalorder %s24, 0
        %s257 = scalar_select %p256, %s24, 0
        %s258 = sadd.s32 %s257, %s255
        %s259 = smul.addr %s258, 4
        %s260 = scalar_lea.vmem %s0, %s259
        %p261 = pneg %p55
        %p262 = pneg %p52
        %p263 = pneg %p76
        %p264 = pneg %p73
        %p265 = pneg %p97
        %p266 = pneg %p94
        %p267 = pneg %p118
        %p268 = pneg %p115
        %p269 = pneg %p139
        %p270 = pneg %p136
        %p271 = pneg %p160
        %p272 = pneg %p157
        %p273 = pneg %p186
        %p274 = pneg %p183
        %s275 = smul.u32 4, %s25
        %p276 = scmp.lt.s32.totalorder %s275, 7
        %s277 = scalar_select %p276, %s275, 7
        %p278 = scmp.lt.s32.totalorder %s24, 0
        %s279 = scalar_select %p278, %s24, 0
        %s280 = sadd.s32 %s279, %s277
        %s281 = smul.addr %s280, 4
        %s282 = scalar_lea.vmem %s0, %s281
        %s283 = smul.u32 4, %s25
        %p285 = scmp.eq.s32.totalorder %s25, 0
        // Predicated region
        $region49: #{tpu_custom_call.1} parent=43 // pred_check
          %p286 = pneg %p285
        $region50: #{tpu_custom_call.1} parent=43 // pred_check_branch
          %288 = sbr.rel (%p286) target = $region52
        $region51: #{tpu_custom_call.1} parent=43 // pred_region
          %289 = vst [vmem:[#allocation2] sm:$0xff] 0.0
        $region52: #{tpu_custom_call.1} parent=43 // pred_fallthru
          _
        %v290 = vld [vmem:[%s282] sm:$0xf]
        %v291 = vld [vmem:[%s282 + $0x4] sm:$0xf]
        %v292 = vld [vmem:[%s282 + $0x8] sm:$0xf]
        %v293 = vld [vmem:[%s282 + $0xc] sm:$0xf]
        %v294 = vld [vmem:[%s1] sm:$0x3]
        %v299 = vunpack.c.l.b16 %v290
        %v300 = vunpack.c.l.b16 %v291
        %v301 = vunpack.c.l.b16 %v292
        %v302 = vunpack.c.l.b16 %v293
        %v303 = vpack.c.b16 %v300, %v299
        %v304 = vpack.c.b16 %v302, %v301
        %vm305 = vcmask 31744
        %v307 = vsel %vm305, %v303, 0
        %v310 = vsel %vm305, %v304, 0
        %vm312 = vcmask 1041408
        %v314 = vsel %vm312, %v294, 0
        %316 = vmatprep.subr.bf16.mxu0 0
        %317 = vmatpush1.bf16.msra.mxu0 %v314
        %318 = vmatprep.subr.bf16.mxu0 0
        %319 = vmatpush1.bf16.msra.mxu0 0
        %320 = vmatprep.subr.bf16.mxu0 0
        %321 = vmatpush1.bf16.msra.mxu0 0
        %322 = vmatprep.subr.bf16.mxu0 0
        %323 = vmatpush1.bf16.msra.mxu0 0
        %324 = vmatprep.subr.bf16.mxu0 0
        %325 = vmatpush1.bf16.msra.mxu0 0
        %326 = vmatprep.subr.bf16.mxu0 0
        %327 = vmatpush1.bf16.msra.mxu0 0
        %328 = vmatprep.subr.bf16.mxu0 0
        %329 = vmatpush1.bf16.msra.mxu0 0
        %330 = vmatprep.subr.bf16.mxu0 0
        %331 = vmatpush1.bf16.msra.mxu0 0
        %332 = vmatprep.subr.bf16.mxu0 0
        %333 = vmatpush1.bf16.msra.mxu0 0
        %334 = vmatprep.subr.bf16.mxu0 0
        %335 = vmatpush1.bf16.msra.mxu0 0
        %336 = vmatprep.subr.bf16.mxu0 0
        %337 = vmatpush1.bf16.msra.mxu0 0
        %338 = vmatprep.subr.bf16.mxu0 0
        %339 = vmatpush1.bf16.msra.mxu0 0
        %340 = vmatprep.subr.bf16.mxu0 0
        %341 = vmatpush1.bf16.msra.mxu0 0
        %342 = vmatprep.subr.bf16.mxu0 0
        %343 = vmatpush1.bf16.msra.mxu0 0
        %344 = vmatprep.subr.bf16.mxu0 0
        %345 = vmatpush1.bf16.msra.mxu0 0
        %346 = vmatprep.subr.bf16.mxu0 0
        %347 = vmatpush1.bf16.msra.mxu0 0
        %348 = vmatprep.mubr.bf16.mxu0 0
        %349 = vmatmul.mubr.bf16.gmra.mrb[0].mxu0 %v307
        %v350 = vpop.f32.mrb[0].mxu0
        %v351 = vadd.f32 0.0, %v350
        %v352 = vpop.f32.mrb[0].mxu0
        %v353 = vpop.f32.mrb[0].mxu0
        %v354 = vadd.f32 0.0, %v353
        %v355 = vpop.f32.mrb[0].mxu0
        %356 = vmatprep.mubr.bf16.mxu0 0
        %357 = vmatmul.mubr.bf16.gmra.mrb[0].mxu0 %v310
        %v358 = vpop.f32.mrb[0].mxu0
        %v359 = vadd.f32 0.0, %v358
        %v360 = vpop.f32.mrb[0].mxu0
        %v361 = vpop.f32.mrb[0].mxu0
        %v362 = vadd.f32 0.0, %v361
        %v363 = vpop.f32.mrb[0].mxu0
        %364 = vdwg.mxu0
        %v365 = vld [vmem:[%s3] sm:$0x1]
        %v367 = vlaneseq
        %v368 = vshrl.u32 %v367, 7
        %v369 = vsub.s32 0, %v368
        %v370 = vrot.slane %v365, %v369
        %v372 = vadd.f32 %v351, %v370
        %v373 = vadd.f32 %v354, %v370
        %v374 = vadd.f32 %v359, %v370
        %v375 = vadd.f32 %v362, %v370
        %v376 = vpack.c.bf16 %v372, %v372
        %v377 = vpack.c.bf16 %v373, %v373
        %v378 = vpack.c.bf16 %v374, %v374
        %v379 = vpack.c.bf16 %v375, %v375
        %380 = vst [vmem:[#allocation3] sm:$0xf] %v376
        %381 = vst [vmem:[#allocation3 + $0x4] sm:$0xf] %v377
        %382 = vst [vmem:[#allocation3 + $0x8] sm:$0xf] %v378
        %383 = vst [vmem:[#allocation3 + $0xc] sm:$0xf] %v379
        %v384 = vld [vmem:[#allocation5] sm:$0xf]
        %v385 = vld [vmem:[#allocation5 + $0x4] sm:$0xf]
        %v386 = vld [vmem:[#allocation5 + $0x8] sm:$0xf]
        %v387 = vld [vmem:[#allocation5 + $0xc] sm:$0xf]
        %v388 = vld [vmem:[#allocation5 + $0x10] sm:$0xf]
        %v389 = vld [vmem:[#allocation5 + $0x14] sm:$0xf]
        %v390 = vld [vmem:[#allocation5 + $0x18] sm:$0xf]
        %v391 = vld [vmem:[#allocation5 + $0x1c] sm:$0xf]
        %v392 = vld [vmem:[#allocation5 + $0x20] sm:$0xf]
        %v393 = vld [vmem:[#allocation5 + $0x24] sm:$0xf]
        %v394 = vld [vmem:[#allocation5 + $0x28] sm:$0xf]
        %v395 = vld [vmem:[#allocation5 + $0x2c] sm:$0xf]
        %v396 = vld [vmem:[#allocation5 + $0x30] sm:$0xf]
        %v397 = vld [vmem:[#allocation5 + $0x34] sm:$0xf]
        %v398 = vld [vmem:[#allocation5 + $0x38] sm:$0xf]
        %v399 = vld [vmem:[#allocation5 + $0x3c] sm:$0xf]
        %v400 = vld [vmem:[#allocation2] sm:$0xff]
        %v401 = vld [vmem:[#allocation3] sm:$0xf]
        %v402 = vunpack.c.l.bf16 %v401
        %v403 = vpack.c.bf16 %v400, %v400
        %v420 = vunpack.c.l.b16 %v384
        %v421 = vunpack.c.l.b16 %v385
        %v422 = vunpack.c.l.b16 %v386
        %v423 = vunpack.c.l.b16 %v387
        %v424 = vunpack.c.l.b16 %v388
        %v425 = vunpack.c.l.b16 %v389
        %v426 = vunpack.c.l.b16 %v390
        %v427 = vunpack.c.l.b16 %v391
        %v428 = vunpack.c.l.b16 %v392
        %v429 = vunpack.c.l.b16 %v393
        %v430 = vunpack.c.l.b16 %v394
        %v431 = vunpack.c.l.b16 %v395
        %v432 = vunpack.c.l.b16 %v396
        %v433 = vunpack.c.l.b16 %v397
        %v434 = vunpack.c.l.b16 %v398
        %v435 = vunpack.c.l.b16 %v399
        %v436 = vpack.c.b16 %v421, %v420
        %v437 = vpack.c.b16 %v423, %v422
        %v438 = vpack.c.b16 %v425, %v424
        %v439 = vpack.c.b16 %v427, %v426
        %v440 = vpack.c.b16 %v429, %v428
        %v441 = vpack.c.b16 %v431, %v430
        %v442 = vpack.c.b16 %v433, %v432
        %v443 = vpack.c.b16 %v435, %v434
        %452 = vmatprep.subr.bf16.mxu0 0
        %453 = vmatpush1.bf16.msra.mxu0 %v436
        %454 = vmatprep.subr.bf16.mxu0 0
        %455 = vmatpush1.bf16.msra.mxu0 %v437
        %456 = vmatprep.subr.bf16.mxu0 0
        %457 = vmatpush1.bf16.msra.mxu0 %v438
        %458 = vmatprep.subr.bf16.mxu0 0
        %459 = vmatpush1.bf16.msra.mxu0 %v439
        %460 = vmatprep.subr.bf16.mxu0 0
        %461 = vmatpush1.bf16.msra.mxu0 %v440
        %462 = vmatprep.subr.bf16.mxu0 0
        %463 = vmatpush1.bf16.msra.mxu0 %v441
        %464 = vmatprep.subr.bf16.mxu0 0
        %465 = vmatpush1.bf16.msra.mxu0 %v442
        %466 = vmatprep.subr.bf16.mxu0 0
        %467 = vmatpush1.bf16.msra.mxu0 %v443
        %468 = vmatprep.subr.bf16.mxu0 0
        %469 = vmatpush1.bf16.msra.mxu0 0
        %470 = vmatprep.subr.bf16.mxu0 0
        %471 = vmatpush1.bf16.msra.mxu0 0
        %472 = vmatprep.subr.bf16.mxu0 0
        %473 = vmatpush1.bf16.msra.mxu0 0
        %474 = vmatprep.subr.bf16.mxu0 0
        %475 = vmatpush1.bf16.msra.mxu0 0
        %476 = vmatprep.subr.bf16.mxu0 0
        %477 = vmatpush1.bf16.msra.mxu0 0
        %478 = vmatprep.subr.bf16.mxu0 0
        %479 = vmatpush1.bf16.msra.mxu0 0
        %480 = vmatprep.subr.bf16.mxu0 0
        %481 = vmatpush1.bf16.msra.mxu0 0
        %482 = vmatprep.subr.bf16.mxu0 0
        %483 = vmatpush1.bf16.msra.mxu0 0
        %484 = vmatprep.mubr.bf16.mxu0 0
        %485 = vmatmul.mubr.bf16.gmra.mrb[0].mxu0 %v403
        %v486 = vpop.f32.mrb[0].mxu0
        %v487 = vadd.f32 0.0, %v486
        %v488 = vpop.f32.mrb[0].mxu0
        %v489 = vpop.f32.mrb[0].mxu0
        %v490 = vpop.f32.mrb[0].mxu0
        %491 = vdwg.mxu0
        %v492 = vadd.f32 %v402, %v487
        %v493 = vtanh.pop %v492
        %s494 = scalar_lea.vmem [#allocation3], 4
        %v495 = vld [vmem:[%s494] sm:$0xf]
        %v496 = vunpack.c.l.bf16 %v495
        %v497 = vpack.c.bf16 %v493, %v493
        %498 = vmatprep.subr.bf16.mxu0 0
        %499 = vmatpush1.bf16.msra.mxu0 %v436
        %500 = vmatprep.subr.bf16.mxu0 0
        %501 = vmatpush1.bf16.msra.mxu0 %v437
        %502 = vmatprep.subr.bf16.mxu0 0
        %503 = vmatpush1.bf16.msra.mxu0 %v438
        %504 = vmatprep.subr.bf16.mxu0 0
        %505 = vmatpush1.bf16.msra.mxu0 %v439
        %506 = vmatprep.subr.bf16.mxu0 0
        %507 = vmatpush1.bf16.msra.mxu0 %v440
        %508 = vmatprep.subr.bf16.mxu0 0
        %509 = vmatpush1.bf16.msra.mxu0 %v441
        %510 = vmatprep.subr.bf16.mxu0 0
        %511 = vmatpush1.bf16.msra.mxu0 %v442
        %512 = vmatprep.subr.bf16.mxu0 0
        %513 = vmatpush1.bf16.msra.mxu0 %v443
        %514 = vmatprep.subr.bf16.mxu0 0
        %515 = vmatpush1.bf16.msra.mxu0 0
        %516 = vmatprep.subr.bf16.mxu0 0
        %517 = vmatpush1.bf16.msra.mxu0 0
        %518 = vmatprep.subr.bf16.mxu0 0
        %519 = vmatpush1.bf16.msra.mxu0 0
        %520 = vmatprep.subr.bf16.mxu0 0
        %521 = vmatpush1.bf16.msra.mxu0 0
        %522 = vmatprep.subr.bf16.mxu0 0
        %523 = vmatpush1.bf16.msra.mxu0 0
        %524 = vmatprep.subr.bf16.mxu0 0
        %525 = vmatpush1.bf16.msra.mxu0 0
        %526 = vmatprep.subr.bf16.mxu0 0
        %527 = vmatpush1.bf16.msra.mxu0 0
        %528 = vmatprep.subr.bf16.mxu0 0
        %529 = vmatpush1.bf16.msra.mxu0 0
        %530 = vmatprep.mubr.bf16.mxu0 0
        %531 = vmatmul.mubr.bf16.gmra.mrb[0].mxu0 %v497
        %v532 = vpop.f32.mrb[0].mxu0
        %v533 = vadd.f32 0.0, %v532
        %v534 = vpop.f32.mrb[0].mxu0
        %v535 = vpop.f32.mrb[0].mxu0
        %v536 = vpop.f32.mrb[0].mxu0
        %537 = vdwg.mxu0
        %v538 = vadd.f32 %v496, %v533
        %v539 = vtanh.pop %v538
        %s540 = scalar_lea.vmem [#allocation3], 8
        %v541 = vld [vmem:[%s540] sm:$0xf]
        %v542 = vunpack.c.l.bf16 %v541
        %v543 = vpack.c.bf16 %v539, %v539
        %544 = vmatprep.subr.bf16.mxu0 0
        %545 = vmatpush1.bf16.msra.mxu0 %v436
        %546 = vmatprep.subr.bf16.mxu0 0
        %547 = vmatpush1.bf16.msra.mxu0 %v437
        %548 = vmatprep.subr.bf16.mxu0 0
        %549 = vmatpush1.bf16.msra.mxu0 %v438
        %550 = vmatprep.subr.bf16.mxu0 0
        %551 = vmatpush1.bf16.msra.mxu0 %v439
        %552 = vmatprep.subr.bf16.mxu0 0
        %553 = vmatpush1.bf16.msra.mxu0 %v440
        %554 = vmatprep.subr.bf16.mxu0 0
        %555 = vmatpush1.bf16.msra.mxu0 %v441
        %556 = vmatprep.subr.bf16.mxu0 0
        %557 = vmatpush1.bf16.msra.mxu0 %v442
        %558 = vmatprep.subr.bf16.mxu0 0
        %559 = vmatpush1.bf16.msra.mxu0 %v443
        %560 = vmatprep.subr.bf16.mxu0 0
        %561 = vmatpush1.bf16.msra.mxu0 0
        %562 = vmatprep.subr.bf16.mxu0 0
        %563 = vmatpush1.bf16.msra.mxu0 0
        %564 = vmatprep.subr.bf16.mxu0 0
        %565 = vmatpush1.bf16.msra.mxu0 0
        %566 = vmatprep.subr.bf16.mxu0 0
        %567 = vmatpush1.bf16.msra.mxu0 0
        %568 = vmatprep.subr.bf16.mxu0 0
        %569 = vmatpush1.bf16.msra.mxu0 0
        %570 = vmatprep.subr.bf16.mxu0 0
        %571 = vmatpush1.bf16.msra.mxu0 0
        %572 = vmatprep.subr.bf16.mxu0 0
        %573 = vmatpush1.bf16.msra.mxu0 0
        %574 = vmatprep.subr.bf16.mxu0 0
        %575 = vmatpush1.bf16.msra.mxu0 0
        %576 = vmatprep.mubr.bf16.mxu0 0
        %577 = vmatmul.mubr.bf16.gmra.mrb[0].mxu0 %v543
        %v578 = vpop.f32.mrb[0].mxu0
        %v579 = vadd.f32 0.0, %v578
        %v580 = vpop.f32.mrb[0].mxu0
        %v581 = vpop.f32.mrb[0].mxu0
        %v582 = vpop.f32.mrb[0].mxu0
        %583 = vdwg.mxu0
        %v584 = vadd.f32 %v542, %v579
        %v585 = vtanh.pop %v584
        %s586 = scalar_lea.vmem [#allocation3], 12
        %v587 = vld [vmem:[%s586] sm:$0xf]
        %v588 = vunpack.c.l.bf16 %v587
        %v589 = vpack.c.bf16 %v585, %v585
        %590 = vmatprep.subr.bf16.mxu0 0
        %591 = vmatpush1.bf16.msra.mxu0 %v436
        %592 = vmatprep.subr.bf16.mxu0 0
        %593 = vmatpush1.bf16.msra.mxu0 %v437
        %594 = vmatprep.subr.bf16.mxu0 0
        %595 = vmatpush1.bf16.msra.mxu0 %v438
        %596 = vmatprep.subr.bf16.mxu0 0
        %597 = vmatpush1.bf16.msra.mxu0 %v439
        %598 = vmatprep.subr.bf16.mxu0 0
        %599 = vmatpush1.bf16.msra.mxu0 %v440
        %600 = vmatprep.subr.bf16.mxu0 0
        %601 = vmatpush1.bf16.msra.mxu0 %v441
        %602 = vmatprep.subr.bf16.mxu0 0
        %603 = vmatpush1.bf16.msra.mxu0 %v442
        %604 = vmatprep.subr.bf16.mxu0 0
        %605 = vmatpush1.bf16.msra.mxu0 %v443
        %606 = vmatprep.subr.bf16.mxu0 0
        %607 = vmatpush1.bf16.msra.mxu0 0
        %608 = vmatprep.subr.bf16.mxu0 0
        %609 = vmatpush1.bf16.msra.mxu0 0
        %610 = vmatprep.subr.bf16.mxu0 0
        %611 = vmatpush1.bf16.msra.mxu0 0
        %612 = vmatprep.subr.bf16.mxu0 0
        %613 = vmatpush1.bf16.msra.mxu0 0
        %614 = vmatprep.subr.bf16.mxu0 0
        %615 = vmatpush1.bf16.msra.mxu0 0
        %616 = vmatprep.subr.bf16.mxu0 0
        %617 = vmatpush1.bf16.msra.mxu0 0
        %618 = vmatprep.subr.bf16.mxu0 0
        %619 = vmatpush1.bf16.msra.mxu0 0
        %620 = vmatprep.subr.bf16.mxu0 0
        %621 = vmatpush1.bf16.msra.mxu0 0
        %622 = vmatprep.mubr.bf16.mxu0 0
        %623 = vmatmul.mubr.bf16.gmra.mrb[0].mxu0 %v589
        %v624 = vpop.f32.mrb[0].mxu0
        %v625 = vadd.f32 0.0, %v624
        %v626 = vpop.f32.mrb[0].mxu0
        %v627 = vpop.f32.mrb[0].mxu0
        %v628 = vpop.f32.mrb[0].mxu0
        %629 = vdwg.mxu0
        %v630 = vadd.f32 %v588, %v625
        %v631 = vtanh.pop %v630
        %632 = vst [vmem:[#allocation2] sm:$0xff] %v631
        %p633 = scmp.eq.s32.totalorder %s25, 1
        // Predicated region
        $region53: #{tpu_custom_call.1} parent=43 // pred_check
          %p634 = pneg %p633
        $region54: #{tpu_custom_call.1} parent=43 // pred_check_branch
          %636 = sbr.rel (%p634) target = $region56
        $region55: #{tpu_custom_call.1} parent=43 // pred_region
          %v637 = vld [vmem:[#allocation2] sm:$0xff]
          %v638 = vld [vmem:[%s4] sm:$0x1]
          %v640 = vlaneseq
          %v641 = vshrl.u32 %v640, 7
          %v642 = vsub.s32 0, %v641
          %v643 = vrot.slane %v638, %v642
          %v645 = vmul.f32 %v637, %v643
          %646 = vadd.xlane.f32.xlu0 %v645
          %v647 = vpop.xlane.xlu0 %646
          %s648 = sld [smem:[#allocation4]]
          %v649 = vstv %s648
          %v650 = vadd.f32 %v647, %v649
          %651 = vst [vmem:[#allocation8] sm:$0xff] %v650
        $region56: #{tpu_custom_call.1} parent=43 // pred_fallthru
          _
        // Predicated region
        $region57: #{tpu_custom_call.1} parent=43 // pred_check
          %p652 = pneg %p183
        $region58: #{tpu_custom_call.1} parent=43 // pred_check_branch
          %654 = sbr.rel (%p652) target = $region60
        $region59: #{tpu_custom_call.1} parent=43 // pred_region
          %s656 = ssub.s32 128, 128
          %657 = vsyncadd [#allocation7], %s656
          %s658 = smul.addr %s24, 128
          %s659 = scalar_lea.hbm %s6, %s658
          %s661 = sshll.u32 [#allocation8], 4
          %s662 = int_to_ptr.vmem [resolvable:$true] %s661
          %664 = dma.vmem_to_hbm [thread:$0]  %s662, 128, %s659, [#allocation7]
        $region60: #{tpu_custom_call.1} parent=43 // pred_fallthru
          _
        // Predicated region
        $region61: #{tpu_custom_call.1} parent=43 // pred_check
          %p665 = pneg %p183
        $region62: #{tpu_custom_call.1} parent=43 // pred_check_branch
          %667 = sbr.rel (%p665) target = $region64
        $region63: #{tpu_custom_call.1} parent=43 // pred_region
          %668 = dma.done [#allocation7], 128
        $region64: #{tpu_custom_call.1} parent=43 // pred_fallthru
          _
      $region44: #{tpu_custom_call.1} parent=5 // pred_fallthru
        _
      %p669 = scmp.le.s32.totalorder 2, %s15
      // Predicated region
      $region65: #{tpu_custom_call.1} parent=5 // pred_check
        %p670 = pneg %p669
      $region66: #{tpu_custom_call.1} parent=5 // pred_check_branch
        %672 = sbr.rel (%p670) target = $region68
      $region67: #{tpu_custom_call.1} parent=5 // pred_region
        %s673 = ssub.s32 %s15, 2
      $region68: #{tpu_custom_call.1} parent=5 // pred_fallthru
        _
    $region6: #{tpu_custom_call.1} parent=1 // loop_footer
      %s19 = sadd.s32 1, %s15
    $region7: #{tpu_custom_call.1} parent=1 // loop_footer_branch
      %14 = sbr.rel target = $region3
    $region8: #{tpu_custom_call.1} parent=1 // loop_exit
      _
    %674 = vsyncpa [#allocation6], 1
    %s675 = scalar_lea.sflag [#allocation6], 1
    %676 = vsyncpa %s675, 1
    %677 = vsyncpa [#allocation7], 1
    %s678 = scalar_lea.sflag [#allocation7], 1
    %679 = vsyncpa %s678, 1

</llo_original>
